<compile_context>
chip_gen: v6e
topology: v6e:2x2x1
jax: 0.10.0
libtpu: 0.0.40
codegen_flags: <defaults>
</compile_context>

<pallas_src>
import functools

import jax
import jax.numpy as jnp
import numpy as np
from jax import lax
from jax.experimental import pallas as pl
from jax.experimental.pallas import tpu as pltpu

LANE = 128
SUBLANE = 8


def _round_up(v, m):
    return (v + m - 1) // m * m


# ---------------------------------------------------------------------------
# Fused kernel factory: conv(3x3, SAME, +bias) -> relu -> global avg pool -> fc
# One grid step processes a B_TILE-sized batch tile.
# ---------------------------------------------------------------------------
def _make_fused_kernel(B, Cin, H, W, COUT_PAD, want_conv, want_pool):
    HW = H * W

    def kernel(xflat_ref, wtap_ref, bc_ref, wf_ref, bf_ref, *out_refs):
        # xflat_ref: (B, Cin, LFLAT)   H-padded, front/back-padded flat image
        # wtap_ref:  (9, COUT_PAD, Cin) per-tap conv weights (zero pad rows)
        # bc_ref:    (1, COUT_PAD, 1)   conv bias
        # wf_ref:    (COUT_PAD, NCLS_PAD) fc weight (zero pad rows/cols)
        # bf_ref:    (1, NCLS_PAD)      fc bias
        # out_refs:  [conv (B,COUT_PAD,HW)]? [pool (B,COUT_PAD)]? fc (B,NCLS_PAD)
        idx = 0
        conv_ref = pool_ref = None
        if want_conv:
            conv_ref = out_refs[idx]; idx += 1
        if want_pool:
            pool_ref = out_refs[idx]; idx += 1
        fc_ref = out_refs[idx]

        xf = xflat_ref[...]                                      # (B, Cin, LFLAT)
        # lane index -> column index, for masking the horizontal border taps
        col = lax.broadcasted_iota(jnp.int32, (1, HW), 1) % W    # (1, HW)

        accs = []
        for n in range(B):                                       # static tile loop
            acc = jnp.zeros((COUT_PAD, HW), jnp.float32)
            for kh in range(3):
                for kw in range(3):
                    start = kh * W + kw                          # static lane offset
                    xs = xf[n, :, start:start + HW]              # (Cin, HW)
                    # Horizontal SAME-padding: the flat-shift trick wraps across
                    # rows on the left/right border column; zero it out.
                    if kw == 0:
                        xs = jnp.where(col == 0, 0.0, xs)
                    elif kw == 2:
                        xs = jnp.where(col == W - 1, 0.0, xs)
                    acc = acc + jnp.dot(wtap_ref[kh * 3 + kw], xs,
                                        preferred_element_type=jnp.float32)
            accs.append(acc[None])                               # (1, COUT_PAD, HW)

        acc_b = jnp.concatenate(accs, axis=0) + bc_ref[...]      # (B, COUT_PAD, HW)

        if want_conv:
            # Pre-relu conv output ('conv1'): already channel-major == NCHW.
            conv_ref[...] = acc_b.astype(conv_ref.dtype)

        # relu + adaptive avg pool fused as a lane reduction (no HBM pass).
        pooled = jnp.sum(jnp.maximum(acc_b, 0.0), axis=-1) * (1.0 / HW)  # (B, COUT_PAD)
        if want_pool:
            pool_ref[...] = pooled.astype(pool_ref.dtype)

        # fc on the already-resident pooled rows; x.view(N, -1) is implicit.
        logits = jnp.dot(pooled, wf_ref[...],
                         preferred_element_type=jnp.float32) + bf_ref[...]
        fc_ref[...] = logits.astype(fc_ref.dtype)

    return kernel


@functools.partial(jax.jit, static_argnames=("want_conv", "want_pool"))
def _fused_forward(x, w_taps, bc, wf, bf, *, want_conv, want_pool):
    """x: (N, Cin, H, W) NCHW. Returns (conv|None, pool|None, fc) padded slabs."""
    N, Cin, H, W = x.shape
    HW = H * W
    COUT_PAD = w_taps.shape[1]
    NCLS_PAD = wf.shape[1]

    # Thin in-graph prep: pad H by 1 on each side, flatten (H+2, W) -> flat,
    # add one leading zero so every conv-tap offset (kh*W + kw) is a
    # non-negative static lane slice inside the kernel, round lanes up to 128.
    LFLAT = _round_up((H + 2) * W + 2, LANE)
    xp = jnp.pad(x, ((0, 0), (0, 0), (1, 1), (0, 0)))            # (N, Cin, H+2, W)
    xflat = xp.reshape(N, Cin, (H + 2) * W)
    xflat = jnp.pad(xflat, ((0, 0), (0, 0), (1, LFLAT - 1 - (H + 2) * W)))

    B_TILE = N  # whole (small) batch in a single grid step; tile for larger N
    kernel = _make_fused_kernel(B_TILE, Cin, H, W, COUT_PAD, want_conv, want_pool)

    out_shapes, out_specs = [], []
    if want_conv:
        out_shapes.append(jax.ShapeDtypeStruct((N, COUT_PAD, HW), x.dtype))
        out_specs.append(pl.BlockSpec((B_TILE, COUT_PAD, HW), lambda i: (i, 0, 0)))
    if want_pool:
        out_shapes.append(jax.ShapeDtypeStruct((N, COUT_PAD), x.dtype))
        out_specs.append(pl.BlockSpec((B_TILE, COUT_PAD), lambda i: (i, 0)))
    out_shapes.append(jax.ShapeDtypeStruct((N, NCLS_PAD), x.dtype))
    out_specs.append(pl.BlockSpec((B_TILE, NCLS_PAD), lambda i: (i, 0)))

    # Weight blocks are grid-invariant; with a single grid step double-buffering
    # is moot, so the plain specs are fine (use pl.Buffered(1) if B_TILE < N).
    outs = pl.pallas_call(
        kernel,
        out_shape=tuple(out_shapes),
        grid=(N // B_TILE,),
        in_specs=[
            pl.BlockSpec((B_TILE, Cin, LFLAT), lambda i: (i, 0, 0)),
            pl.BlockSpec(w_taps.shape, lambda i: (0, 0, 0)),
            pl.BlockSpec(bc.shape, lambda i: (0, 0, 0)),
            pl.BlockSpec(wf.shape, lambda i: (0, 0)),
            pl.BlockSpec(bf.shape, lambda i: (0, 0)),
        ],
        out_specs=tuple(out_specs),
        compiler_params=pltpu.CompilerParams(
            dimension_semantics=("parallel",)),  # batch tiles shard across TCs
    )(xflat, w_taps, bc, wf, bf)

    outs = list(outs)
    conv = outs.pop(0) if want_conv else None
    pool = outs.pop(0) if want_pool else None
    fc = outs.pop(0)
    return conv, pool, fc


# ---------------------------------------------------------------------------
# Backbone + FeatureExtractor (mirrors the torch module semantics)
# ---------------------------------------------------------------------------
class SmallBackbone:
    """Deterministic conv1 -> relu -> avgpool -> fc backbone (the canonical
    module order the torch FeatureExtractor is used with)."""

    module_names = ('conv1', 'relu', 'avgpool', 'fc')

    def __init__(self, conv_w, conv_b, fc_w, fc_b):
        Cout, Cin, kh, kw = conv_w.shape
        assert (kh, kw) == (3, 3), "backbone uses a 3x3 SAME conv"
        num_classes = fc_w.shape[0]
        self.Cout, self.num_classes = Cout, num_classes

        COUT_PAD = _round_up(max(Cout, SUBLANE), SUBLANE)
        NCLS_PAD = _round_up(max(num_classes, LANE), LANE)
        dt = conv_w.dtype

        # Padded weight/bias slabs built ONCE here (not per forward call).
        # w_taps[kh*3+kw, cout, cin] = conv_w[cout, cin, kh, kw]
        w_taps = conv_w.transpose(2, 3, 0, 1).reshape(9, Cout, Cin)
        self.w_taps = jnp.zeros((9, COUT_PAD, Cin), dt).at[:, :Cout, :].set(w_taps)
        self.bc = jnp.zeros((1, COUT_PAD, 1), dt).at[0, :Cout, 0].set(conv_b)
        self.wf = jnp.zeros((COUT_PAD, NCLS_PAD), dt).at[:Cout, :num_classes].set(fc_w.T)
        self.bf = jnp.zeros((1, NCLS_PAD), dt).at[0, :num_classes].set(fc_b)

    def forward_extract(self, x, extracted_layers):
        """Runs the whole module chain as ONE fused Pallas kernel and returns
        {name: module_output} for the requested module boundaries."""
        N, _, H, W = x.shape
        want_conv = ('conv1' in extracted_layers) or ('relu' in extracted_layers)
        want_pool = ('avgpool' in extracted_layers)

        conv_pad, pool_pad, fc_pad = _fused_forward(
            x, self.w_taps, self.bc, self.wf, self.bf,
            want_conv=want_conv, want_pool=want_pool)

        feats = {}
        if want_conv:
            # Channel-major output is already NCHW: slice + reshape only.
            conv = conv_pad[:, :self.Cout, :].reshape(N, self.Cout, H, W)
            if 'conv1' in extracted_layers:
                feats['conv1'] = conv
            if 'relu' in extracted_layers:
                feats['relu'] = jnp.maximum(conv, 0.0)
        if want_pool:
            feats['avgpool'] = pool_pad[:, :self.Cout].reshape(N, self.Cout, 1, 1)
        if 'fc' in extracted_layers:
            feats['fc'] = fc_pad[:, :self.num_classes]
        return feats


class FeatureExtractor:
    """Mirrors torch FeatureExtractor.forward: iterate the model's modules in
    order, flatten before 'fc', collect outputs of extracted_layers.  The
    module chain executes as a single fused Pallas kernel; the loop only does
    output selection and ordering."""

    def __init__(self, model, extracted_layers):
        self.model = model
        self.extracted_layers = extracted_layers

    def __call__(self, x):
        feats = self.model.forward_extract(x, self.extracted_layers)
        outputs = []
        for name in self.model.module_names:
            # x.view(x.size(0), -1) before 'fc' is implicit: the pooled (N, C)
            # rows feed the fc matmul inside the fused kernel.
            if name in self.extracted_layers:
                outputs.append(feats[name])
        return outputs


# ---------------------------------------------------------------------------
if __name__ == "__main__":
    N, Cin, H, W = 2, 4, 16, 16
    Cout, num_classes = 8, 10

    # Deterministic params + input (synthetic, not a checkpoint).
    k0, k1, k2, k3, k4 = jax.random.split(jax.random.PRNGKey(0), 5)
    conv_w = jax.random.normal(k1, (Cout, Cin, 3, 3), jnp.float32) * 0.1
    conv_b = jax.random.normal(k2, (Cout,), jnp.float32) * 0.1
    fc_w = jax.random.normal(k3, (num_classes, Cout), jnp.float32) * 0.1  # torch (out, in)
    fc_b = jax.random.normal(k4, (num_classes,), jnp.float32) * 0.1
    x = jax.random.normal(k0, (N, Cin, H, W), jnp.float32)

    model = SmallBackbone(conv_w, conv_b, fc_w, fc_b)
    extractor = FeatureExtractor(model, extracted_layers=['conv1', 'fc'])

    outs = jax.block_until_ready(extractor(x))

    # Pure-JAX reference for a sanity check.
    ref_conv = jax.lax.conv_general_dilated(
        x, conv_w, (1, 1), 'SAME',
        dimension_numbers=('NCHW', 'OIHW', 'NCHW')) + conv_b.reshape(1, -1, 1, 1)
    ref_pooled = jnp.maximum(ref_conv, 0.0).mean(axis=(2, 3))
    ref_fc = ref_pooled @ fc_w.T + fc_b

    assert len(outs) == 2
    assert outs[0].shape == (N, Cout, H, W)
    assert outs[1].shape == (N, num_classes)
    assert np.allclose(np.asarray(outs[0]), np.asarray(ref_conv), atol=1e-4)
    assert np.allclose(np.asarray(outs[1]), np.asarray(ref_fc), atol=1e-4)

    print("KERNEL_OK")
</pallas_src>

<mosaic_0001>
module attributes {stable_mosaic.version = 11 : i64} {
  func.func @kernel(%arg0: i32, %arg1: memref<2x4x384xf32, #tpu.memory_space<vmem>>, %arg2: memref<9x8x4xf32, #tpu.memory_space<vmem>>, %arg3: memref<1x8x1xf32, #tpu.memory_space<vmem>>, %arg4: memref<8x128xf32, #tpu.memory_space<vmem>>, %arg5: memref<1x128xf32, #tpu.memory_space<vmem>>, %arg6: memref<2x8x256xf32, #tpu.memory_space<vmem>>, %arg7: memref<2x128xf32, #tpu.memory_space<vmem>>) attributes {dimension_semantics = [#tpu.dimension_semantics<parallel>], iteration_bounds = array<i64: 1>, scalar_prefetch = 0 : i64, scratch_operands = 0 : i64, tpu.core_type = #tpu.core_type<tc>, window_params = [{transform_indices = @transform_0, window_bounds = array<i64: 2, 4, 384>}, {pipeline_mode = #tpu.pipeline_mode<synchronous>, transform_indices = @transform_1, window_bounds = array<i64: 9, 8, 4>}, {pipeline_mode = #tpu.pipeline_mode<synchronous>, transform_indices = @transform_2, window_bounds = array<i64: 1, 8, 1>}, {pipeline_mode = #tpu.pipeline_mode<synchronous>, transform_indices = @transform_3, window_bounds = array<i64: 8, 128>}, {pipeline_mode = #tpu.pipeline_mode<synchronous>, transform_indices = @transform_4, window_bounds = array<i64: 1, 128>}, {transform_indices = @transform_5, window_bounds = array<i64: 2, 8, 256>}, {transform_indices = @transform_6, window_bounds = array<i64: 2, 128>}]} {
    %c0 = arith.constant 0 : index
    %c0_0 = arith.constant 0 : index
    %c0_1 = arith.constant 0 : index
    %0 = vector.load %arg1[%c0, %c0_0, %c0_1] : memref<2x4x384xf32, #tpu.memory_space<vmem>>, vector<2x4x384xf32>
    %1 = tpu.iota {dimensions = array<i32: 1>} : vector<1x256xi32>
    %c16_i32 = arith.constant 16 : i32
    %c0_i32 = arith.constant 0 : i32
    %2 = arith.cmpi eq, %c16_i32, %c0_i32 : i32
    %c1_i32 = arith.constant 1 : i32
    %3 = arith.select %2, %c1_i32, %c16_i32 : i32
    %4 = vector.broadcast %3 : i32 to vector<1x256xi32>
    %5 = arith.remsi %1, %4 : vector<1x256xi32>
    %c0_i32_2 = arith.constant 0 : i32
    %6 = vector.broadcast %c0_i32_2 : i32 to vector<1x256xi32>
    %7 = arith.cmpi ne, %5, %6 : vector<1x256xi32>
    %c0_i32_3 = arith.constant 0 : i32
    %8 = vector.broadcast %c0_i32_3 : i32 to vector<1x256xi32>
    %9 = arith.cmpi slt, %5, %8 : vector<1x256xi32>
    %c0_i32_4 = arith.constant 0 : i32
    %10 = arith.cmpi slt, %3, %c0_i32_4 : i32
    %11 = vector.broadcast %10 : i1 to vector<1x256xi1>
    %12 = vector.broadcast %11 : vector<1x256xi1> to vector<1x256xi1>
    %13 = arith.xori %9, %12 : vector<1x256xi1>
    %14 = arith.andi %13, %7 : vector<1x256xi1>
    %15 = vector.broadcast %3 : i32 to vector<1x256xi32>
    %16 = arith.addi %5, %15 : vector<1x256xi32>
    %17 = arith.select %14, %16, %5 : vector<1x256xi1>, vector<1x256xi32>
    %cst = arith.constant 0.000000e+00 : f32
    %18 = vector.broadcast %cst : f32 to vector<8x256xf32>
    %19 = vector.extract_strided_slice %0 {offsets = [0, 0, 0], sizes = [1, 4, 256], strides = [1, 1, 1]} : vector<2x4x384xf32> to vector<1x4x256xf32>
    %20 = vector.shape_cast %19 : vector<1x4x256xf32> to vector<4x256xf32>
    %c0_i32_5 = arith.constant 0 : i32
    %21 = vector.broadcast %c0_i32_5 : i32 to vector<1x256xi32>
    %22 = arith.cmpi eq, %17, %21 : vector<1x256xi32>
    %cst_6 = arith.constant 0.000000e+00 : f32
    %23 = vector.shape_cast %22 : vector<1x256xi1> to vector<1x256xi1>
    %24 = vector.broadcast %23 : vector<1x256xi1> to vector<4x256xi1>
    %25 = vector.broadcast %cst_6 : f32 to vector<4x256xf32>
    %26 = arith.select %24, %25, %20 : vector<4x256xi1>, vector<4x256xf32>
    %c0_7 = arith.constant 0 : index
    %c0_8 = arith.constant 0 : index
    %c0_9 = arith.constant 0 : index
    %27 = vector.load %arg2[%c0_7, %c0_8, %c0_9] : memref<9x8x4xf32, #tpu.memory_space<vmem>>, vector<1x8x4xf32>
    %28 = vector.shape_cast %27 : vector<1x8x4xf32> to vector<8x4xf32>
    %cst_10 = arith.constant dense<0.000000e+00> : vector<8x256xf32>
    %29 = tpu.matmul %28, %26, %cst_10 {dimension_numbers = #tpu.dot_dimension_numbers<[1], [0], [0], [1], [0, 0, 1, 1], [], []>} : vector<8x4xf32>, vector<4x256xf32>, vector<8x256xf32> -> vector<8x256xf32>
    %30 = arith.addf %18, %29 : vector<8x256xf32>
    %31 = vector.extract_strided_slice %0 {offsets = [0, 0, 1], sizes = [1, 4, 256], strides = [1, 1, 1]} : vector<2x4x384xf32> to vector<1x4x256xf32>
    %32 = vector.shape_cast %31 : vector<1x4x256xf32> to vector<4x256xf32>
    %c1 = arith.constant 1 : index
    %c0_11 = arith.constant 0 : index
    %c0_12 = arith.constant 0 : index
    %33 = vector.load %arg2[%c1, %c0_11, %c0_12] : memref<9x8x4xf32, #tpu.memory_space<vmem>>, vector<1x8x4xf32>
    %34 = vector.shape_cast %33 : vector<1x8x4xf32> to vector<8x4xf32>
    %cst_13 = arith.constant dense<0.000000e+00> : vector<8x256xf32>
    %35 = tpu.matmul %34, %32, %cst_13 {dimension_numbers = #tpu.dot_dimension_numbers<[1], [0], [0], [1], [0, 0, 1, 1], [], []>} : vector<8x4xf32>, vector<4x256xf32>, vector<8x256xf32> -> vector<8x256xf32>
    %36 = arith.addf %30, %35 : vector<8x256xf32>
    %37 = vector.extract_strided_slice %0 {offsets = [0, 0, 2], sizes = [1, 4, 256], strides = [1, 1, 1]} : vector<2x4x384xf32> to vector<1x4x256xf32>
    %38 = vector.shape_cast %37 : vector<1x4x256xf32> to vector<4x256xf32>
    %c15_i32 = arith.constant 15 : i32
    %39 = vector.broadcast %c15_i32 : i32 to vector<1x256xi32>
    %40 = arith.cmpi eq, %17, %39 : vector<1x256xi32>
    %cst_14 = arith.constant 0.000000e+00 : f32
    %41 = vector.shape_cast %40 : vector<1x256xi1> to vector<1x256xi1>
    %42 = vector.broadcast %41 : vector<1x256xi1> to vector<4x256xi1>
    %43 = vector.broadcast %cst_14 : f32 to vector<4x256xf32>
    %44 = arith.select %42, %43, %38 : vector<4x256xi1>, vector<4x256xf32>
    %c2 = arith.constant 2 : index
    %c0_15 = arith.constant 0 : index
    %c0_16 = arith.constant 0 : index
    %45 = vector.load %arg2[%c2, %c0_15, %c0_16] : memref<9x8x4xf32, #tpu.memory_space<vmem>>, vector<1x8x4xf32>
    %46 = vector.shape_cast %45 : vector<1x8x4xf32> to vector<8x4xf32>
    %cst_17 = arith.constant dense<0.000000e+00> : vector<8x256xf32>
    %47 = tpu.matmul %46, %44, %cst_17 {dimension_numbers = #tpu.dot_dimension_numbers<[1], [0], [0], [1], [0, 0, 1, 1], [], []>} : vector<8x4xf32>, vector<4x256xf32>, vector<8x256xf32> -> vector<8x256xf32>
    %48 = arith.addf %36, %47 : vector<8x256xf32>
    %49 = vector.extract_strided_slice %0 {offsets = [0, 0, 16], sizes = [1, 4, 256], strides = [1, 1, 1]} : vector<2x4x384xf32> to vector<1x4x256xf32>
    %50 = vector.shape_cast %49 : vector<1x4x256xf32> to vector<4x256xf32>
    %c0_i32_18 = arith.constant 0 : i32
    %51 = vector.broadcast %c0_i32_18 : i32 to vector<1x256xi32>
    %52 = arith.cmpi eq, %17, %51 : vector<1x256xi32>
    %cst_19 = arith.constant 0.000000e+00 : f32
    %53 = vector.shape_cast %52 : vector<1x256xi1> to vector<1x256xi1>
    %54 = vector.broadcast %53 : vector<1x256xi1> to vector<4x256xi1>
    %55 = vector.broadcast %cst_19 : f32 to vector<4x256xf32>
    %56 = arith.select %54, %55, %50 : vector<4x256xi1>, vector<4x256xf32>
    %c3 = arith.constant 3 : index
    %c0_20 = arith.constant 0 : index
    %c0_21 = arith.constant 0 : index
    %57 = vector.load %arg2[%c3, %c0_20, %c0_21] : memref<9x8x4xf32, #tpu.memory_space<vmem>>, vector<1x8x4xf32>
    %58 = vector.shape_cast %57 : vector<1x8x4xf32> to vector<8x4xf32>
    %cst_22 = arith.constant dense<0.000000e+00> : vector<8x256xf32>
    %59 = tpu.matmul %58, %56, %cst_22 {dimension_numbers = #tpu.dot_dimension_numbers<[1], [0], [0], [1], [0, 0, 1, 1], [], []>} : vector<8x4xf32>, vector<4x256xf32>, vector<8x256xf32> -> vector<8x256xf32>
    %60 = arith.addf %48, %59 : vector<8x256xf32>
    %61 = vector.extract_strided_slice %0 {offsets = [0, 0, 17], sizes = [1, 4, 256], strides = [1, 1, 1]} : vector<2x4x384xf32> to vector<1x4x256xf32>
    %62 = vector.shape_cast %61 : vector<1x4x256xf32> to vector<4x256xf32>
    %c4 = arith.constant 4 : index
    %c0_23 = arith.constant 0 : index
    %c0_24 = arith.constant 0 : index
    %63 = vector.load %arg2[%c4, %c0_23, %c0_24] : memref<9x8x4xf32, #tpu.memory_space<vmem>>, vector<1x8x4xf32>
    %64 = vector.shape_cast %63 : vector<1x8x4xf32> to vector<8x4xf32>
    %cst_25 = arith.constant dense<0.000000e+00> : vector<8x256xf32>
    %65 = tpu.matmul %64, %62, %cst_25 {dimension_numbers = #tpu.dot_dimension_numbers<[1], [0], [0], [1], [0, 0, 1, 1], [], []>} : vector<8x4xf32>, vector<4x256xf32>, vector<8x256xf32> -> vector<8x256xf32>
    %66 = arith.addf %60, %65 : vector<8x256xf32>
    %67 = vector.extract_strided_slice %0 {offsets = [0, 0, 18], sizes = [1, 4, 256], strides = [1, 1, 1]} : vector<2x4x384xf32> to vector<1x4x256xf32>
    %68 = vector.shape_cast %67 : vector<1x4x256xf32> to vector<4x256xf32>
    %c15_i32_26 = arith.constant 15 : i32
    %69 = vector.broadcast %c15_i32_26 : i32 to vector<1x256xi32>
    %70 = arith.cmpi eq, %17, %69 : vector<1x256xi32>
    %cst_27 = arith.constant 0.000000e+00 : f32
    %71 = vector.shape_cast %70 : vector<1x256xi1> to vector<1x256xi1>
    %72 = vector.broadcast %71 : vector<1x256xi1> to vector<4x256xi1>
    %73 = vector.broadcast %cst_27 : f32 to vector<4x256xf32>
    %74 = arith.select %72, %73, %68 : vector<4x256xi1>, vector<4x256xf32>
    %c5 = arith.constant 5 : index
    %c0_28 = arith.constant 0 : index
    %c0_29 = arith.constant 0 : index
    %75 = vector.load %arg2[%c5, %c0_28, %c0_29] : memref<9x8x4xf32, #tpu.memory_space<vmem>>, vector<1x8x4xf32>
    %76 = vector.shape_cast %75 : vector<1x8x4xf32> to vector<8x4xf32>
    %cst_30 = arith.constant dense<0.000000e+00> : vector<8x256xf32>
    %77 = tpu.matmul %76, %74, %cst_30 {dimension_numbers = #tpu.dot_dimension_numbers<[1], [0], [0], [1], [0, 0, 1, 1], [], []>} : vector<8x4xf32>, vector<4x256xf32>, vector<8x256xf32> -> vector<8x256xf32>
    %78 = arith.addf %66, %77 : vector<8x256xf32>
    %79 = vector.extract_strided_slice %0 {offsets = [0, 0, 32], sizes = [1, 4, 256], strides = [1, 1, 1]} : vector<2x4x384xf32> to vector<1x4x256xf32>
    %80 = vector.shape_cast %79 : vector<1x4x256xf32> to vector<4x256xf32>
    %c0_i32_31 = arith.constant 0 : i32
    %81 = vector.broadcast %c0_i32_31 : i32 to vector<1x256xi32>
    %82 = arith.cmpi eq, %17, %81 : vector<1x256xi32>
    %cst_32 = arith.constant 0.000000e+00 : f32
    %83 = vector.shape_cast %82 : vector<1x256xi1> to vector<1x256xi1>
    %84 = vector.broadcast %83 : vector<1x256xi1> to vector<4x256xi1>
    %85 = vector.broadcast %cst_32 : f32 to vector<4x256xf32>
    %86 = arith.select %84, %85, %80 : vector<4x256xi1>, vector<4x256xf32>
    %c6 = arith.constant 6 : index
    %c0_33 = arith.constant 0 : index
    %c0_34 = arith.constant 0 : index
    %87 = vector.load %arg2[%c6, %c0_33, %c0_34] : memref<9x8x4xf32, #tpu.memory_space<vmem>>, vector<1x8x4xf32>
    %88 = vector.shape_cast %87 : vector<1x8x4xf32> to vector<8x4xf32>
    %cst_35 = arith.constant dense<0.000000e+00> : vector<8x256xf32>
    %89 = tpu.matmul %88, %86, %cst_35 {dimension_numbers = #tpu.dot_dimension_numbers<[1], [0], [0], [1], [0, 0, 1, 1], [], []>} : vector<8x4xf32>, vector<4x256xf32>, vector<8x256xf32> -> vector<8x256xf32>
    %90 = arith.addf %78, %89 : vector<8x256xf32>
    %91 = vector.extract_strided_slice %0 {offsets = [0, 0, 33], sizes = [1, 4, 256], strides = [1, 1, 1]} : vector<2x4x384xf32> to vector<1x4x256xf32>
    %92 = vector.shape_cast %91 : vector<1x4x256xf32> to vector<4x256xf32>
    %c7 = arith.constant 7 : index
    %c0_36 = arith.constant 0 : index
    %c0_37 = arith.constant 0 : index
    %93 = vector.load %arg2[%c7, %c0_36, %c0_37] : memref<9x8x4xf32, #tpu.memory_space<vmem>>, vector<1x8x4xf32>
    %94 = vector.shape_cast %93 : vector<1x8x4xf32> to vector<8x4xf32>
    %cst_38 = arith.constant dense<0.000000e+00> : vector<8x256xf32>
    %95 = tpu.matmul %94, %92, %cst_38 {dimension_numbers = #tpu.dot_dimension_numbers<[1], [0], [0], [1], [0, 0, 1, 1], [], []>} : vector<8x4xf32>, vector<4x256xf32>, vector<8x256xf32> -> vector<8x256xf32>
    %96 = arith.addf %90, %95 : vector<8x256xf32>
    %97 = vector.extract_strided_slice %0 {offsets = [0, 0, 34], sizes = [1, 4, 256], strides = [1, 1, 1]} : vector<2x4x384xf32> to vector<1x4x256xf32>
    %98 = vector.shape_cast %97 : vector<1x4x256xf32> to vector<4x256xf32>
    %c15_i32_39 = arith.constant 15 : i32
    %99 = vector.broadcast %c15_i32_39 : i32 to vector<1x256xi32>
    %100 = arith.cmpi eq, %17, %99 : vector<1x256xi32>
    %cst_40 = arith.constant 0.000000e+00 : f32
    %101 = vector.shape_cast %100 : vector<1x256xi1> to vector<1x256xi1>
    %102 = vector.broadcast %101 : vector<1x256xi1> to vector<4x256xi1>
    %103 = vector.broadcast %cst_40 : f32 to vector<4x256xf32>
    %104 = arith.select %102, %103, %98 : vector<4x256xi1>, vector<4x256xf32>
    %c8 = arith.constant 8 : index
    %c0_41 = arith.constant 0 : index
    %c0_42 = arith.constant 0 : index
    %105 = vector.load %arg2[%c8, %c0_41, %c0_42] : memref<9x8x4xf32, #tpu.memory_space<vmem>>, vector<1x8x4xf32>
    %106 = vector.shape_cast %105 : vector<1x8x4xf32> to vector<8x4xf32>
    %cst_43 = arith.constant dense<0.000000e+00> : vector<8x256xf32>
    %107 = tpu.matmul %106, %104, %cst_43 {dimension_numbers = #tpu.dot_dimension_numbers<[1], [0], [0], [1], [0, 0, 1, 1], [], []>} : vector<8x4xf32>, vector<4x256xf32>, vector<8x256xf32> -> vector<8x256xf32>
    %108 = arith.addf %96, %107 : vector<8x256xf32>
    %109 = vector.shape_cast %108 : vector<8x256xf32> to vector<1x8x256xf32>
    %cst_44 = arith.constant 0.000000e+00 : f32
    %110 = vector.broadcast %cst_44 : f32 to vector<8x256xf32>
    %111 = vector.extract_strided_slice %0 {offsets = [1, 0, 0], sizes = [1, 4, 256], strides = [1, 1, 1]} : vector<2x4x384xf32> to vector<1x4x256xf32>
    %112 = vector.shape_cast %111 : vector<1x4x256xf32> to vector<4x256xf32>
    %c0_i32_45 = arith.constant 0 : i32
    %113 = vector.broadcast %c0_i32_45 : i32 to vector<1x256xi32>
    %114 = arith.cmpi eq, %17, %113 : vector<1x256xi32>
    %cst_46 = arith.constant 0.000000e+00 : f32
    %115 = vector.shape_cast %114 : vector<1x256xi1> to vector<1x256xi1>
    %116 = vector.broadcast %115 : vector<1x256xi1> to vector<4x256xi1>
    %117 = vector.broadcast %cst_46 : f32 to vector<4x256xf32>
    %118 = arith.select %116, %117, %112 : vector<4x256xi1>, vector<4x256xf32>
    %c0_47 = arith.constant 0 : index
    %c0_48 = arith.constant 0 : index
    %c0_49 = arith.constant 0 : index
    %119 = vector.load %arg2[%c0_47, %c0_48, %c0_49] : memref<9x8x4xf32, #tpu.memory_space<vmem>>, vector<1x8x4xf32>
    %120 = vector.shape_cast %119 : vector<1x8x4xf32> to vector<8x4xf32>
    %cst_50 = arith.constant dense<0.000000e+00> : vector<8x256xf32>
    %121 = tpu.matmul %120, %118, %cst_50 {dimension_numbers = #tpu.dot_dimension_numbers<[1], [0], [0], [1], [0, 0, 1, 1], [], []>} : vector<8x4xf32>, vector<4x256xf32>, vector<8x256xf32> -> vector<8x256xf32>
    %122 = arith.addf %110, %121 : vector<8x256xf32>
    %123 = vector.extract_strided_slice %0 {offsets = [1, 0, 1], sizes = [1, 4, 256], strides = [1, 1, 1]} : vector<2x4x384xf32> to vector<1x4x256xf32>
    %124 = vector.shape_cast %123 : vector<1x4x256xf32> to vector<4x256xf32>
    %c1_51 = arith.constant 1 : index
    %c0_52 = arith.constant 0 : index
    %c0_53 = arith.constant 0 : index
    %125 = vector.load %arg2[%c1_51, %c0_52, %c0_53] : memref<9x8x4xf32, #tpu.memory_space<vmem>>, vector<1x8x4xf32>
    %126 = vector.shape_cast %125 : vector<1x8x4xf32> to vector<8x4xf32>
    %cst_54 = arith.constant dense<0.000000e+00> : vector<8x256xf32>
    %127 = tpu.matmul %126, %124, %cst_54 {dimension_numbers = #tpu.dot_dimension_numbers<[1], [0], [0], [1], [0, 0, 1, 1], [], []>} : vector<8x4xf32>, vector<4x256xf32>, vector<8x256xf32> -> vector<8x256xf32>
    %128 = arith.addf %122, %127 : vector<8x256xf32>
    %129 = vector.extract_strided_slice %0 {offsets = [1, 0, 2], sizes = [1, 4, 256], strides = [1, 1, 1]} : vector<2x4x384xf32> to vector<1x4x256xf32>
    %130 = vector.shape_cast %129 : vector<1x4x256xf32> to vector<4x256xf32>
    %c15_i32_55 = arith.constant 15 : i32
    %131 = vector.broadcast %c15_i32_55 : i32 to vector<1x256xi32>
    %132 = arith.cmpi eq, %17, %131 : vector<1x256xi32>
    %cst_56 = arith.constant 0.000000e+00 : f32
    %133 = vector.shape_cast %132 : vector<1x256xi1> to vector<1x256xi1>
    %134 = vector.broadcast %133 : vector<1x256xi1> to vector<4x256xi1>
    %135 = vector.broadcast %cst_56 : f32 to vector<4x256xf32>
    %136 = arith.select %134, %135, %130 : vector<4x256xi1>, vector<4x256xf32>
    %c2_57 = arith.constant 2 : index
    %c0_58 = arith.constant 0 : index
    %c0_59 = arith.constant 0 : index
    %137 = vector.load %arg2[%c2_57, %c0_58, %c0_59] : memref<9x8x4xf32, #tpu.memory_space<vmem>>, vector<1x8x4xf32>
    %138 = vector.shape_cast %137 : vector<1x8x4xf32> to vector<8x4xf32>
    %cst_60 = arith.constant dense<0.000000e+00> : vector<8x256xf32>
    %139 = tpu.matmul %138, %136, %cst_60 {dimension_numbers = #tpu.dot_dimension_numbers<[1], [0], [0], [1], [0, 0, 1, 1], [], []>} : vector<8x4xf32>, vector<4x256xf32>, vector<8x256xf32> -> vector<8x256xf32>
    %140 = arith.addf %128, %139 : vector<8x256xf32>
    %141 = vector.extract_strided_slice %0 {offsets = [1, 0, 16], sizes = [1, 4, 256], strides = [1, 1, 1]} : vector<2x4x384xf32> to vector<1x4x256xf32>
    %142 = vector.shape_cast %141 : vector<1x4x256xf32> to vector<4x256xf32>
    %c0_i32_61 = arith.constant 0 : i32
    %143 = vector.broadcast %c0_i32_61 : i32 to vector<1x256xi32>
    %144 = arith.cmpi eq, %17, %143 : vector<1x256xi32>
    %cst_62 = arith.constant 0.000000e+00 : f32
    %145 = vector.shape_cast %144 : vector<1x256xi1> to vector<1x256xi1>
    %146 = vector.broadcast %145 : vector<1x256xi1> to vector<4x256xi1>
    %147 = vector.broadcast %cst_62 : f32 to vector<4x256xf32>
    %148 = arith.select %146, %147, %142 : vector<4x256xi1>, vector<4x256xf32>
    %c3_63 = arith.constant 3 : index
    %c0_64 = arith.constant 0 : index
    %c0_65 = arith.constant 0 : index
    %149 = vector.load %arg2[%c3_63, %c0_64, %c0_65] : memref<9x8x4xf32, #tpu.memory_space<vmem>>, vector<1x8x4xf32>
    %150 = vector.shape_cast %149 : vector<1x8x4xf32> to vector<8x4xf32>
    %cst_66 = arith.constant dense<0.000000e+00> : vector<8x256xf32>
    %151 = tpu.matmul %150, %148, %cst_66 {dimension_numbers = #tpu.dot_dimension_numbers<[1], [0], [0], [1], [0, 0, 1, 1], [], []>} : vector<8x4xf32>, vector<4x256xf32>, vector<8x256xf32> -> vector<8x256xf32>
    %152 = arith.addf %140, %151 : vector<8x256xf32>
    %153 = vector.extract_strided_slice %0 {offsets = [1, 0, 17], sizes = [1, 4, 256], strides = [1, 1, 1]} : vector<2x4x384xf32> to vector<1x4x256xf32>
    %154 = vector.shape_cast %153 : vector<1x4x256xf32> to vector<4x256xf32>
    %c4_67 = arith.constant 4 : index
    %c0_68 = arith.constant 0 : index
    %c0_69 = arith.constant 0 : index
    %155 = vector.load %arg2[%c4_67, %c0_68, %c0_69] : memref<9x8x4xf32, #tpu.memory_space<vmem>>, vector<1x8x4xf32>
    %156 = vector.shape_cast %155 : vector<1x8x4xf32> to vector<8x4xf32>
    %cst_70 = arith.constant dense<0.000000e+00> : vector<8x256xf32>
    %157 = tpu.matmul %156, %154, %cst_70 {dimension_numbers = #tpu.dot_dimension_numbers<[1], [0], [0], [1], [0, 0, 1, 1], [], []>} : vector<8x4xf32>, vector<4x256xf32>, vector<8x256xf32> -> vector<8x256xf32>
    %158 = arith.addf %152, %157 : vector<8x256xf32>
    %159 = vector.extract_strided_slice %0 {offsets = [1, 0, 18], sizes = [1, 4, 256], strides = [1, 1, 1]} : vector<2x4x384xf32> to vector<1x4x256xf32>
    %160 = vector.shape_cast %159 : vector<1x4x256xf32> to vector<4x256xf32>
    %c15_i32_71 = arith.constant 15 : i32
    %161 = vector.broadcast %c15_i32_71 : i32 to vector<1x256xi32>
    %162 = arith.cmpi eq, %17, %161 : vector<1x256xi32>
    %cst_72 = arith.constant 0.000000e+00 : f32
    %163 = vector.shape_cast %162 : vector<1x256xi1> to vector<1x256xi1>
    %164 = vector.broadcast %163 : vector<1x256xi1> to vector<4x256xi1>
    %165 = vector.broadcast %cst_72 : f32 to vector<4x256xf32>
    %166 = arith.select %164, %165, %160 : vector<4x256xi1>, vector<4x256xf32>
    %c5_73 = arith.constant 5 : index
    %c0_74 = arith.constant 0 : index
    %c0_75 = arith.constant 0 : index
    %167 = vector.load %arg2[%c5_73, %c0_74, %c0_75] : memref<9x8x4xf32, #tpu.memory_space<vmem>>, vector<1x8x4xf32>
    %168 = vector.shape_cast %167 : vector<1x8x4xf32> to vector<8x4xf32>
    %cst_76 = arith.constant dense<0.000000e+00> : vector<8x256xf32>
    %169 = tpu.matmul %168, %166, %cst_76 {dimension_numbers = #tpu.dot_dimension_numbers<[1], [0], [0], [1], [0, 0, 1, 1], [], []>} : vector<8x4xf32>, vector<4x256xf32>, vector<8x256xf32> -> vector<8x256xf32>
    %170 = arith.addf %158, %169 : vector<8x256xf32>
    %171 = vector.extract_strided_slice %0 {offsets = [1, 0, 32], sizes = [1, 4, 256], strides = [1, 1, 1]} : vector<2x4x384xf32> to vector<1x4x256xf32>
    %172 = vector.shape_cast %171 : vector<1x4x256xf32> to vector<4x256xf32>
    %c0_i32_77 = arith.constant 0 : i32
    %173 = vector.broadcast %c0_i32_77 : i32 to vector<1x256xi32>
    %174 = arith.cmpi eq, %17, %173 : vector<1x256xi32>
    %cst_78 = arith.constant 0.000000e+00 : f32
    %175 = vector.shape_cast %174 : vector<1x256xi1> to vector<1x256xi1>
    %176 = vector.broadcast %175 : vector<1x256xi1> to vector<4x256xi1>
    %177 = vector.broadcast %cst_78 : f32 to vector<4x256xf32>
    %178 = arith.select %176, %177, %172 : vector<4x256xi1>, vector<4x256xf32>
    %c6_79 = arith.constant 6 : index
    %c0_80 = arith.constant 0 : index
    %c0_81 = arith.constant 0 : index
    %179 = vector.load %arg2[%c6_79, %c0_80, %c0_81] : memref<9x8x4xf32, #tpu.memory_space<vmem>>, vector<1x8x4xf32>
    %180 = vector.shape_cast %179 : vector<1x8x4xf32> to vector<8x4xf32>
    %cst_82 = arith.constant dense<0.000000e+00> : vector<8x256xf32>
    %181 = tpu.matmul %180, %178, %cst_82 {dimension_numbers = #tpu.dot_dimension_numbers<[1], [0], [0], [1], [0, 0, 1, 1], [], []>} : vector<8x4xf32>, vector<4x256xf32>, vector<8x256xf32> -> vector<8x256xf32>
    %182 = arith.addf %170, %181 : vector<8x256xf32>
    %183 = vector.extract_strided_slice %0 {offsets = [1, 0, 33], sizes = [1, 4, 256], strides = [1, 1, 1]} : vector<2x4x384xf32> to vector<1x4x256xf32>
    %184 = vector.shape_cast %183 : vector<1x4x256xf32> to vector<4x256xf32>
    %c7_83 = arith.constant 7 : index
    %c0_84 = arith.constant 0 : index
    %c0_85 = arith.constant 0 : index
    %185 = vector.load %arg2[%c7_83, %c0_84, %c0_85] : memref<9x8x4xf32, #tpu.memory_space<vmem>>, vector<1x8x4xf32>
    %186 = vector.shape_cast %185 : vector<1x8x4xf32> to vector<8x4xf32>
    %cst_86 = arith.constant dense<0.000000e+00> : vector<8x256xf32>
    %187 = tpu.matmul %186, %184, %cst_86 {dimension_numbers = #tpu.dot_dimension_numbers<[1], [0], [0], [1], [0, 0, 1, 1], [], []>} : vector<8x4xf32>, vector<4x256xf32>, vector<8x256xf32> -> vector<8x256xf32>
    %188 = arith.addf %182, %187 : vector<8x256xf32>
    %189 = vector.extract_strided_slice %0 {offsets = [1, 0, 34], sizes = [1, 4, 256], strides = [1, 1, 1]} : vector<2x4x384xf32> to vector<1x4x256xf32>
    %190 = vector.shape_cast %189 : vector<1x4x256xf32> to vector<4x256xf32>
    %c15_i32_87 = arith.constant 15 : i32
    %191 = vector.broadcast %c15_i32_87 : i32 to vector<1x256xi32>
    %192 = arith.cmpi eq, %17, %191 : vector<1x256xi32>
    %cst_88 = arith.constant 0.000000e+00 : f32
    %193 = vector.shape_cast %192 : vector<1x256xi1> to vector<1x256xi1>
    %194 = vector.broadcast %193 : vector<1x256xi1> to vector<4x256xi1>
    %195 = vector.broadcast %cst_88 : f32 to vector<4x256xf32>
    %196 = arith.select %194, %195, %190 : vector<4x256xi1>, vector<4x256xf32>
    %c8_89 = arith.constant 8 : index
    %c0_90 = arith.constant 0 : index
    %c0_91 = arith.constant 0 : index
    %197 = vector.load %arg2[%c8_89, %c0_90, %c0_91] : memref<9x8x4xf32, #tpu.memory_space<vmem>>, vector<1x8x4xf32>
    %198 = vector.shape_cast %197 : vector<1x8x4xf32> to vector<8x4xf32>
    %cst_92 = arith.constant dense<0.000000e+00> : vector<8x256xf32>
    %199 = tpu.matmul %198, %196, %cst_92 {dimension_numbers = #tpu.dot_dimension_numbers<[1], [0], [0], [1], [0, 0, 1, 1], [], []>} : vector<8x4xf32>, vector<4x256xf32>, vector<8x256xf32> -> vector<8x256xf32>
    %200 = arith.addf %188, %199 : vector<8x256xf32>
    %201 = vector.shape_cast %200 : vector<8x256xf32> to vector<1x8x256xf32>
    %202 = tpu.concatenate %109, %201 in 0 : vector<1x8x256xf32>, vector<1x8x256xf32> -> vector<2x8x256xf32>
    %c0_93 = arith.constant 0 : index
    %c0_94 = arith.constant 0 : index
    %c0_95 = arith.constant 0 : index
    %203 = vector.load %arg3[%c0_93, %c0_94, %c0_95] : memref<1x8x1xf32, #tpu.memory_space<vmem>>, vector<1x8x1xf32>
    %204 = vector.broadcast %203 : vector<1x8x1xf32> to vector<2x8x256xf32>
    %205 = arith.addf %202, %204 : vector<2x8x256xf32>
    %c0_96 = arith.constant 0 : index
    %c0_97 = arith.constant 0 : index
    %c0_98 = arith.constant 0 : index
    %206 = vector.load %arg6[%c0_96, %c0_97, %c0_98] : memref<2x8x256xf32, #tpu.memory_space<vmem>>, vector<2x8x256xf32>
    tpu.vector_store %arg6[%c0_96, %c0_97, %c0_98], %205 {strides = array<i32>} : memref<2x8x256xf32, #tpu.memory_space<vmem>>, vector<2x8x256xf32>,
    %cst_99 = arith.constant 0.000000e+00 : f32
    %207 = vector.broadcast %cst_99 : f32 to vector<2x8x256xf32>
    %208 = arith.maximumf %205, %207 : vector<2x8x256xf32>
    %cst_100 = arith.constant dense<0.000000e+00> : vector<2x8xf32>
    %209 = vector.multi_reduction <add>, %208, %cst_100 [2] : vector<2x8x256xf32> to vector<2x8xf32>
    %cst_101 = arith.constant 3.906250e-03 : f32
    %210 = vector.broadcast %cst_101 : f32 to vector<2x8xf32>
    %211 = arith.mulf %209, %210 : vector<2x8xf32>
    %c0_102 = arith.constant 0 : index
    %c0_103 = arith.constant 0 : index
    %212 = vector.load %arg4[%c0_102, %c0_103] : memref<8x128xf32, #tpu.memory_space<vmem>>, vector<8x128xf32>
    %cst_104 = arith.constant dense<0.000000e+00> : vector<2x128xf32>
    %213 = tpu.matmul %211, %212, %cst_104 {dimension_numbers = #tpu.dot_dimension_numbers<[1], [0], [0], [1], [0, 0, 1, 1], [], []>} : vector<2x8xf32>, vector<8x128xf32>, vector<2x128xf32> -> vector<2x128xf32>
    %c0_105 = arith.constant 0 : index
    %c0_106 = arith.constant 0 : index
    %214 = vector.load %arg5[%c0_105, %c0_106] : memref<1x128xf32, #tpu.memory_space<vmem>>, vector<1x128xf32>
    %215 = vector.broadcast %214 : vector<1x128xf32> to vector<2x128xf32>
    %216 = arith.addf %213, %215 : vector<2x128xf32>
    %c0_107 = arith.constant 0 : index
    %c0_108 = arith.constant 0 : index
    %217 = vector.load %arg7[%c0_107, %c0_108] : memref<2x128xf32, #tpu.memory_space<vmem>>, vector<2x128xf32>
    tpu.vector_store %arg7[%c0_107, %c0_108], %216 {strides = array<i32>} : memref<2x128xf32, #tpu.memory_space<vmem>>, vector<2x128xf32>,
    return
  }
  func.func @transform_0(%arg0: i32) -> (i32, i32, i32) {
    %c0_i32 = arith.constant 0 : i32
    %c0_i32_0 = arith.constant 0 : i32
    %c0_i32_1 = arith.constant 0 : i32
    return %arg0, %c0_i32, %c0_i32_0 : i32, i32, i32
  }
  func.func @transform_1(%arg0: i32) -> (i32, i32, i32) {
    %c0_i32 = arith.constant 0 : i32
    %c0_i32_0 = arith.constant 0 : i32
    %c0_i32_1 = arith.constant 0 : i32
    %c0_i32_2 = arith.constant 0 : i32
    return %c0_i32, %c0_i32_0, %c0_i32_1 : i32, i32, i32
  }
  func.func @transform_2(%arg0: i32) -> (i32, i32, i32) {
    %c0_i32 = arith.constant 0 : i32
    %c0_i32_0 = arith.constant 0 : i32
    %c0_i32_1 = arith.constant 0 : i32
    %c0_i32_2 = arith.constant 0 : i32
    return %c0_i32, %c0_i32_0, %c0_i32_1 : i32, i32, i32
  }
  func.func @transform_3(%arg0: i32) -> (i32, i32) {
    %c0_i32 = arith.constant 0 : i32
    %c0_i32_0 = arith.constant 0 : i32
    %c0_i32_1 = arith.constant 0 : i32
    return %c0_i32, %c0_i32_0 : i32, i32
  }
  func.func @transform_4(%arg0: i32) -> (i32, i32) {
    %c0_i32 = arith.constant 0 : i32
    %c0_i32_0 = arith.constant 0 : i32
    %c0_i32_1 = arith.constant 0 : i32
    return %c0_i32, %c0_i32_0 : i32, i32
  }
  func.func @transform_5(%arg0: i32) -> (i32, i32, i32) {
    %c0_i32 = arith.constant 0 : i32
    %c0_i32_0 = arith.constant 0 : i32
    %c0_i32_1 = arith.constant 0 : i32
    return %arg0, %c0_i32, %c0_i32_0 : i32, i32, i32
  }
  func.func @transform_6(%arg0: i32) -> (i32, i32) {
    %c0_i32 = arith.constant 0 : i32
    %c0_i32_0 = arith.constant 0 : i32
    return %arg0, %c0_i32 : i32, i32
  }
}

</mosaic_0001>

<llo_original>
// kernel: _fused_forward.1
$region0: #{_fused_forward.1}
  #allocation0 [shape = 'u32[]', space=smem, size = 0x4, offset = 0x4, fixed_abs, tag = 'smem constant byte address 0x4 - core index']
  #allocation1 [shape = 'u32[144,128]{1,0:T(1,128)}', space=vmem, size = 0x12000, scoped, tag = 'internal scratch']
  %s0 = inlined_call_operand.vmem [shape: f32[2,4,384], index: 0, kind: input, shape index: {}]
  %s1 = inlined_call_operand.vmem [shape: f32[9,8,4], index: 1, kind: input, shape index: {}]
  %s2 = inlined_call_operand.vmem [shape: f32[1,8,1], index: 2, kind: input, shape index: {}]
  %s3 = inlined_call_operand.vmem [shape: f32[8,128], index: 3, kind: input, shape index: {}]
  %s4 = inlined_call_operand.vmem [shape: f32[1,128], index: 4, kind: input, shape index: {}]
  %s5 = inlined_call_operand.hbm [shape: f32[2,8,256], index: 5, kind: output, shape index: {0}]
  %s6 = inlined_call_operand.hbm [shape: f32[2,128], index: 6, kind: output, shape index: {1}]
  %7 = xla_tuple %s5, %s6
  %s8 = sld [smem:[#allocation0]]
  $region38: #{_fused_forward.1} parent=0
    _
  %s10 = ssub.s32 1, %s8
  %s11 = scalar_select 0, %s10, %s8
  $region1: #{_fused_forward.1} parent=0
    #allocation2 [shape = 'u8[16384]{0}', space=vmem, size = 0x4000, scoped, tag = 'output window, operand 0, single buffered']
    #allocation3 [shape = 's32[1]{0}', space=sflag, size = 0x4, scoped, tag = 'scoped memory for _fused_forward.1']
    #allocation4 [shape = 'u8[1024]{0}', space=vmem, size = 0x400, scoped, tag = 'output window, operand 1, single buffered']
    #allocation5 [shape = 's32[1]{0}', space=sflag, size = 0x4, scoped, tag = 'scoped memory for _fused_forward.1']
    %12 = vsyncpa [#allocation3], 0
    %13 = vsyncpa [#allocation5], 0
    // Predicated region
    $region2: #{_fused_forward.1} parent=1 // pred_check
      _
    $region3: #{_fused_forward.1} parent=1 // pred_check_branch
      %15 = sbr.rel (0) target = $region5
    $region4: #{_fused_forward.1} parent=1 // pred_region
      _
    $region5: #{_fused_forward.1} parent=1 // pred_fallthru
      _
    // Predicated region
    $region6: #{_fused_forward.1} parent=1 // pred_check
      _
    $region7: #{_fused_forward.1} parent=1 // pred_check_branch
      %17 = sbr.rel (0) target = $region9
    $region8: #{_fused_forward.1} parent=1 // pred_region
      _
    $region9: #{_fused_forward.1} parent=1 // pred_fallthru
      _
    // Predicated region
    $region10: #{_fused_forward.1} parent=1 // pred_check
      _
    $region11: #{_fused_forward.1} parent=1 // pred_check_branch
      %19 = sbr.rel (0) target = $region13
    $region12: #{_fused_forward.1} parent=1 // pred_region
      _
    $region13: #{_fused_forward.1} parent=1 // pred_fallthru
      _
    // Predicated region
    $region14: #{_fused_forward.1} parent=1 // pred_check
      _
    $region15: #{_fused_forward.1} parent=1 // pred_check_branch
      %21 = sbr.rel (0) target = $region17
    $region16: #{_fused_forward.1} parent=1 // pred_region
      _
    $region17: #{_fused_forward.1} parent=1 // pred_fallthru
      _
    // Predicated region
    $region18: #{_fused_forward.1} parent=1 // pred_check
      _
    $region19: #{_fused_forward.1} parent=1 // pred_check_branch
      %23 = sbr.rel (0) target = $region21
    $region20: #{_fused_forward.1} parent=1 // pred_region
      _
    $region21: #{_fused_forward.1} parent=1 // pred_fallthru
      _
    %v24 = vld [vmem:[%s0] sm:$0xff]
    %v25 = vld [vmem:[%s0 + $0x8] sm:$0xf]
    %v26 = vld [vmem:[%s0 + $0xc] sm:$0xff]
    %v27 = vld [vmem:[%s0 + $0x14] sm:$0xf]
    %v28 = vlaneseq
    %v29 = vand.u32 %v28, 127
    %v30 = vadd.s32 %v29, 128
    %vm31 = vcmp.lt.s32.totalorder %v29, 0
    %v32 = vsub.s32 0, %v29
    %v33 = vsel %vm31, %v32, %v29
    %v34 = vshrl.u32 %v33, 4
    %v35 = vand.u32 %v33, 15
    %v36 = vsub.s32 0, %v35
    %v37 = vsel %vm31, %v36, %v35
    %vm38 = vcmp.lt.s32.totalorder %v30, 0
    %v39 = vsub.s32 0, %v30
    %v40 = vsel %vm38, %v39, %v30
    %v41 = vshrl.u32 %v40, 4
    %v42 = vand.u32 %v40, 15
    %v43 = vsub.s32 0, %v42
    %v44 = vsel %vm38, %v43, %v42
    %vm45 = vcmp.ne.s32.totalorder %v37, 0
    %vm46 = vcmp.ne.s32.totalorder %v44, 0
    %vm47 = vcmp.lt.s32.totalorder %v37, 0
    %vm48 = vcmp.lt.s32.totalorder %v44, 0
    %vm49 = vmand %vm47, %vm45
    %vm50 = vmand %vm48, %vm46
    %v51 = vadd.s32 %v37, 16
    %v52 = vadd.s32 %v44, 16
    %v53 = vsel %vm49, %v51, %v37
    %v54 = vsel %vm50, %v52, %v44
    %vm55 = vcmp.eq.s32.totalorder %v53, 0
    %vm56 = vcmp.eq.s32.totalorder %v54, 0
    %v57 = vsel %vm55, 1, 0
    %v58 = vsel %vm56, 1, 0
    %vm59 = vcmp.eq.s32.totalorder %v57, 1
    %vm60 = vcmp.eq.s32.totalorder %v58, 1
    %v62 = vcombine.high %v24, %v24
    %v64 = vsel %vm59, 0.0, %v24
    %v65 = vsel %vm60, 0.0, %v62
    %v66 = vld [vmem:[%s1] sm:$0xff]
    %s67 = scalar_lea.vmem %s1, 8
    %v68 = vld [vmem:[%s67] sm:$0xff]
    %70 = vrot.lane.b32.xlu0 %v24, 127
    %v71 = vpop.permute.xlu0 %70
    %72 = vrot.lane.b32.xlu0 %v62, 127
    %v73 = vpop.permute.xlu0 %72
    %74 = vrot.lane.b32.xlu0 %v25, 127
    %v75 = vpop.permute.xlu0 %74
    %vm76 = vcmask 1039360
    %v77 = vsel %vm76, %v71, %v73
    %v78 = vsel %vm76, %v73, %v75
    %vm79 = vcmask 31744
    %v81 = vsel %vm79, %v68, 0
    %vm83 = vcmask 1043456
    %v84 = vsel %vm83, %v77, 0
    %v86 = vsel %vm83, %v78, 0
    %88 = vmatprep.subr.mxu0 0.0
    %89 = vmatpush1.msra.mxu0 0.0
    %90 = vmatprep.subr.mxu0 0.0
    %91 = vmatpush1.msra.mxu0 0.0
    %92 = vmatprep.subr.mxu0 0.0
    %93 = vmatpush1.msra.mxu0 0.0
    %94 = vmatprep.subr.mxu0 0.0
    %95 = vmatpush1.msra.mxu0 0.0
    %96 = vmatprep.subr.mxu0 0.0
    %97 = vmatpush1.msra.mxu0 0.0
    %98 = vmatprep.subr.mxu0 0.0
    %99 = vmatpush1.msra.mxu0 0.0
    %100 = vmatprep.subr.mxu0 0.0
    %101 = vmatpush1.msra.mxu0 0.0
    %102 = vmatprep.subr.mxu0 0.0
    %103 = vmatpush1.msra.mxu0 0.0
    %104 = vmatprep.subr.mxu0 0.0
    %105 = vmatpush1.msra.mxu0 0.0
    %106 = vmatprep.subr.mxu0 0.0
    %107 = vmatpush1.msra.mxu0 0.0
    %108 = vmatprep.subr.mxu0 0.0
    %109 = vmatpush1.msra.mxu0 0.0
    %110 = vmatprep.subr.mxu0 0.0
    %111 = vmatpush1.msra.mxu0 0.0
    %112 = vmatprep.subr.mxu0 0.0
    %113 = vmatpush1.msra.mxu0 0.0
    %114 = vmatprep.subr.mxu0 0.0
    %115 = vmatpush1.msra.mxu0 0.0
    %116 = vmatprep.subr.mxu0 0.0
    %117 = vmatpush1.msra.mxu0 0.0
    %118 = vmatprep.subr.mxu0 %v86
    %119 = vmatpush1.msra.mxu0 %v84
    %120 = vmatprep.subr.mxu0 0.0
    %121 = vmatpush2.msra.mxu0 0.0
    %122 = vmatprep.subr.mxu0 0.0
    %123 = vmatpush2.msra.mxu0 0.0
    %124 = vmatprep.subr.mxu0 0.0
    %125 = vmatpush2.msra.mxu0 0.0
    %126 = vmatprep.subr.mxu0 0.0
    %127 = vmatpush2.msra.mxu0 0.0
    %128 = vmatprep.subr.mxu0 0.0
    %129 = vmatpush2.msra.mxu0 0.0
    %130 = vmatprep.subr.mxu0 0.0
    %131 = vmatpush2.msra.mxu0 0.0
    %132 = vmatprep.subr.mxu0 0.0
    %133 = vmatpush2.msra.mxu0 0.0
    %134 = vmatprep.subr.mxu0 0.0
    %135 = vmatpush2.msra.mxu0 0.0
    %136 = vmatprep.subr.mxu0 0.0
    %137 = vmatpush2.msra.mxu0 0.0
    %138 = vmatprep.subr.mxu0 0.0
    %139 = vmatpush2.msra.mxu0 0.0
    %140 = vmatprep.subr.mxu0 0.0
    %141 = vmatpush2.msra.mxu0 0.0
    %142 = vmatprep.subr.mxu0 0.0
    %143 = vmatpush2.msra.mxu0 0.0
    %144 = vmatprep.subr.mxu0 0.0
    %145 = vmatpush2.msra.mxu0 0.0
    %146 = vmatprep.subr.mxu0 0.0
    %147 = vmatpush2.msra.mxu0 0.0
    %148 = vmatprep.subr.mxu0 0.0
    %149 = vmatpush2.msra.mxu0 0.0
    %150 = vmatprep.subr.mxu0 0.0
    %151 = vmatpush2.msra.mxu0 0.0
    %152 = vmatprep.mubr.f32.mxu0 0.0
    %153 = vmatmul.mubr.f32.gmra.mxu0 %v81
    %v154 = vpop.f32.mrf.mxu0
    %v155 = vadd.f32 0.0, %v154
    %v156 = vpop.f32.mrf.mxu0
    %v157 = vadd.f32 0.0, %v156
    %158 = vdwg.mxu0
    %v160 = vsel %vm79, %v66, 0
    %v163 = vsel %vm83, %v64, 0
    %v166 = vsel %vm83, %v65, 0
    %168 = vmatprep.subr.mxu0 0.0
    %169 = vmatpush1.msra.mxu0 0.0
    %170 = vmatprep.subr.mxu0 0.0
    %171 = vmatpush1.msra.mxu0 0.0
    %172 = vmatprep.subr.mxu0 0.0
    %173 = vmatpush1.msra.mxu0 0.0
    %174 = vmatprep.subr.mxu0 0.0
    %175 = vmatpush1.msra.mxu0 0.0
    %176 = vmatprep.subr.mxu0 0.0
    %177 = vmatpush1.msra.mxu0 0.0
    %178 = vmatprep.subr.mxu0 0.0
    %179 = vmatpush1.msra.mxu0 0.0
    %180 = vmatprep.subr.mxu0 0.0
    %181 = vmatpush1.msra.mxu0 0.0
    %182 = vmatprep.subr.mxu0 0.0
    %183 = vmatpush1.msra.mxu0 0.0
    %184 = vmatprep.subr.mxu0 0.0
    %185 = vmatpush1.msra.mxu0 0.0
    %186 = vmatprep.subr.mxu0 0.0
    %187 = vmatpush1.msra.mxu0 0.0
    %188 = vmatprep.subr.mxu0 0.0
    %189 = vmatpush1.msra.mxu0 0.0
    %190 = vmatprep.subr.mxu0 0.0
    %191 = vmatpush1.msra.mxu0 0.0
    %192 = vmatprep.subr.mxu0 0.0
    %193 = vmatpush1.msra.mxu0 0.0
    %194 = vmatprep.subr.mxu0 0.0
    %195 = vmatpush1.msra.mxu0 0.0
    %196 = vmatprep.subr.mxu0 0.0
    %197 = vmatpush1.msra.mxu0 0.0
    %198 = vmatprep.subr.mxu0 %v166
    %199 = vmatpush1.msra.mxu0 %v163
    %200 = vmatprep.subr.mxu0 0.0
    %201 = vmatpush2.msra.mxu0 0.0
    %202 = vmatprep.subr.mxu0 0.0
    %203 = vmatpush2.msra.mxu0 0.0
    %204 = vmatprep.subr.mxu0 0.0
    %205 = vmatpush2.msra.mxu0 0.0
    %206 = vmatprep.subr.mxu0 0.0
    %207 = vmatpush2.msra.mxu0 0.0
    %208 = vmatprep.subr.mxu0 0.0
    %209 = vmatpush2.msra.mxu0 0.0
    %210 = vmatprep.subr.mxu0 0.0
    %211 = vmatpush2.msra.mxu0 0.0
    %212 = vmatprep.subr.mxu0 0.0
    %213 = vmatpush2.msra.mxu0 0.0
    %214 = vmatprep.subr.mxu0 0.0
    %215 = vmatpush2.msra.mxu0 0.0
    %216 = vmatprep.subr.mxu0 0.0
    %217 = vmatpush2.msra.mxu0 0.0
    %218 = vmatprep.subr.mxu0 0.0
    %219 = vmatpush2.msra.mxu0 0.0
    %220 = vmatprep.subr.mxu0 0.0
    %221 = vmatpush2.msra.mxu0 0.0
    %222 = vmatprep.subr.mxu0 0.0
    %223 = vmatpush2.msra.mxu0 0.0
    %224 = vmatprep.subr.mxu0 0.0
    %225 = vmatpush2.msra.mxu0 0.0
    %226 = vmatprep.subr.mxu0 0.0
    %227 = vmatpush2.msra.mxu0 0.0
    %228 = vmatprep.subr.mxu0 0.0
    %229 = vmatpush2.msra.mxu0 0.0
    %230 = vmatprep.subr.mxu0 0.0
    %231 = vmatpush2.msra.mxu0 0.0
    %232 = vmatprep.mubr.f32.mxu0 0.0
    %233 = vmatmul.mubr.f32.gmra.mxu0 %v160
    %v234 = vpop.f32.mrf.mxu0
    %v235 = vadd.f32 %v155, %v234
    %v236 = vpop.f32.mrf.mxu0
    %v237 = vadd.f32 %v157, %v236
    %238 = vdwg.mxu0
    %vm239 = vcmp.eq.s32.totalorder %v53, 15
    %vm240 = vcmp.eq.s32.totalorder %v54, 15
    %v241 = vsel %vm239, 1, 0
    %v242 = vsel %vm240, 1, 0
    %vm243 = vcmp.eq.s32.totalorder %v241, 1
    %vm244 = vcmp.eq.s32.totalorder %v242, 1
    %245 = vrot.lane.b32.xlu0 %v24, 126
    %v246 = vpop.permute.xlu0 %245
    %247 = vrot.lane.b32.xlu0 %v62, 126
    %v248 = vpop.permute.xlu0 %247
    %249 = vrot.lane.b32.xlu0 %v25, 126
    %v250 = vpop.permute.xlu0 %249
    %vm251 = vcmask 1031168
    %v252 = vsel %vm251, %v246, %v248
    %v253 = vsel %vm251, %v248, %v250
    %v256 = vsel %vm243, 0.0, %v252
    %v257 = vsel %vm244, 0.0, %v253
    %s258 = scalar_lea.vmem %s1, 16
    %v259 = vld [vmem:[%s258] sm:$0xff]
    %v261 = vsel %vm79, %v259, 0
    %v264 = vsel %vm83, %v256, 0
    %v267 = vsel %vm83, %v257, 0
    %269 = vmatprep.subr.mxu0 0.0
    %270 = vmatpush1.msra.mxu0 0.0
    %271 = vmatprep.subr.mxu0 0.0
    %272 = vmatpush1.msra.mxu0 0.0
    %273 = vmatprep.subr.mxu0 0.0
    %274 = vmatpush1.msra.mxu0 0.0
    %275 = vmatprep.subr.mxu0 0.0
    %276 = vmatpush1.msra.mxu0 0.0
    %277 = vmatprep.subr.mxu0 0.0
    %278 = vmatpush1.msra.mxu0 0.0
    %279 = vmatprep.subr.mxu0 0.0
    %280 = vmatpush1.msra.mxu0 0.0
    %281 = vmatprep.subr.mxu0 0.0
    %282 = vmatpush1.msra.mxu0 0.0
    %283 = vmatprep.subr.mxu0 0.0
    %284 = vmatpush1.msra.mxu0 0.0
    %285 = vmatprep.subr.mxu0 0.0
    %286 = vmatpush1.msra.mxu0 0.0
    %287 = vmatprep.subr.mxu0 0.0
    %288 = vmatpush1.msra.mxu0 0.0
    %289 = vmatprep.subr.mxu0 0.0
    %290 = vmatpush1.msra.mxu0 0.0
    %291 = vmatprep.subr.mxu0 0.0
    %292 = vmatpush1.msra.mxu0 0.0
    %293 = vmatprep.subr.mxu0 0.0
    %294 = vmatpush1.msra.mxu0 0.0
    %295 = vmatprep.subr.mxu0 0.0
    %296 = vmatpush1.msra.mxu0 0.0
    %297 = vmatprep.subr.mxu0 0.0
    %298 = vmatpush1.msra.mxu0 0.0
    %299 = vmatprep.subr.mxu0 %v267
    %300 = vmatpush1.msra.mxu0 %v264
    %301 = vmatprep.subr.mxu0 0.0
    %302 = vmatpush2.msra.mxu0 0.0
    %303 = vmatprep.subr.mxu0 0.0
    %304 = vmatpush2.msra.mxu0 0.0
    %305 = vmatprep.subr.mxu0 0.0
    %306 = vmatpush2.msra.mxu0 0.0
    %307 = vmatprep.subr.mxu0 0.0
    %308 = vmatpush2.msra.mxu0 0.0
    %309 = vmatprep.subr.mxu0 0.0
    %310 = vmatpush2.msra.mxu0 0.0
    %311 = vmatprep.subr.mxu0 0.0
    %312 = vmatpush2.msra.mxu0 0.0
    %313 = vmatprep.subr.mxu0 0.0
    %314 = vmatpush2.msra.mxu0 0.0
    %315 = vmatprep.subr.mxu0 0.0
    %316 = vmatpush2.msra.mxu0 0.0
    %317 = vmatprep.subr.mxu0 0.0
    %318 = vmatpush2.msra.mxu0 0.0
    %319 = vmatprep.subr.mxu0 0.0
    %320 = vmatpush2.msra.mxu0 0.0
    %321 = vmatprep.subr.mxu0 0.0
    %322 = vmatpush2.msra.mxu0 0.0
    %323 = vmatprep.subr.mxu0 0.0
    %324 = vmatpush2.msra.mxu0 0.0
    %325 = vmatprep.subr.mxu0 0.0
    %326 = vmatpush2.msra.mxu0 0.0
    %327 = vmatprep.subr.mxu0 0.0
    %328 = vmatpush2.msra.mxu0 0.0
    %329 = vmatprep.subr.mxu0 0.0
    %330 = vmatpush2.msra.mxu0 0.0
    %331 = vmatprep.subr.mxu0 0.0
    %332 = vmatpush2.msra.mxu0 0.0
    %333 = vmatprep.mubr.f32.mxu0 0.0
    %334 = vmatmul.mubr.f32.gmra.mxu0 %v261
    %v335 = vpop.f32.mrf.mxu0
    %v336 = vadd.f32 0.0, %v335
    %v337 = vpop.f32.mrf.mxu0
    %v338 = vadd.f32 0.0, %v337
    %339 = vdwg.mxu0
    %v340 = vadd.f32 %v235, %v336
    %v341 = vadd.f32 %v237, %v338
    %342 = vrot.lane.b32.xlu0 %v24, 112
    %v343 = vpop.permute.xlu0 %342
    %344 = vrot.lane.b32.xlu0 %v62, 112
    %v345 = vpop.permute.xlu0 %344
    %346 = vrot.lane.b32.xlu0 %v25, 112
    %v347 = vpop.permute.xlu0 %346
    %vm348 = vcmask 916480
    %v349 = vsel %vm348, %v343, %v345
    %v350 = vsel %vm348, %v345, %v347
    %v353 = vsel %vm59, 0.0, %v349
    %v354 = vsel %vm60, 0.0, %v350
    %s355 = scalar_lea.vmem %s1, 24
    %v356 = vld [vmem:[%s355] sm:$0xff]
    %v358 = vsel %vm79, %v356, 0
    %v361 = vsel %vm83, %v353, 0
    %v364 = vsel %vm83, %v354, 0
    %366 = vmatprep.subr.mxu0 0.0
    %367 = vmatpush1.msra.mxu0 0.0
    %368 = vmatprep.subr.mxu0 0.0
    %369 = vmatpush1.msra.mxu0 0.0
    %370 = vmatprep.subr.mxu0 0.0
    %371 = vmatpush1.msra.mxu0 0.0
    %372 = vmatprep.subr.mxu0 0.0
    %373 = vmatpush1.msra.mxu0 0.0
    %374 = vmatprep.subr.mxu0 0.0
    %375 = vmatpush1.msra.mxu0 0.0
    %376 = vmatprep.subr.mxu0 0.0
    %377 = vmatpush1.msra.mxu0 0.0
    %378 = vmatprep.subr.mxu0 0.0
    %379 = vmatpush1.msra.mxu0 0.0
    %380 = vmatprep.subr.mxu0 0.0
    %381 = vmatpush1.msra.mxu0 0.0
    %382 = vmatprep.subr.mxu0 0.0
    %383 = vmatpush1.msra.mxu0 0.0
    %384 = vmatprep.subr.mxu0 0.0
    %385 = vmatpush1.msra.mxu0 0.0
    %386 = vmatprep.subr.mxu0 0.0
    %387 = vmatpush1.msra.mxu0 0.0
    %388 = vmatprep.subr.mxu0 0.0
    %389 = vmatpush1.msra.mxu0 0.0
    %390 = vmatprep.subr.mxu0 0.0
    %391 = vmatpush1.msra.mxu0 0.0
    %392 = vmatprep.subr.mxu0 0.0
    %393 = vmatpush1.msra.mxu0 0.0
    %394 = vmatprep.subr.mxu0 0.0
    %395 = vmatpush1.msra.mxu0 0.0
    %396 = vmatprep.subr.mxu0 %v364
    %397 = vmatpush1.msra.mxu0 %v361
    %398 = vmatprep.subr.mxu0 0.0
    %399 = vmatpush2.msra.mxu0 0.0
    %400 = vmatprep.subr.mxu0 0.0
    %401 = vmatpush2.msra.mxu0 0.0
    %402 = vmatprep.subr.mxu0 0.0
    %403 = vmatpush2.msra.mxu0 0.0
    %404 = vmatprep.subr.mxu0 0.0
    %405 = vmatpush2.msra.mxu0 0.0
    %406 = vmatprep.subr.mxu0 0.0
    %407 = vmatpush2.msra.mxu0 0.0
    %408 = vmatprep.subr.mxu0 0.0
    %409 = vmatpush2.msra.mxu0 0.0
    %410 = vmatprep.subr.mxu0 0.0
    %411 = vmatpush2.msra.mxu0 0.0
    %412 = vmatprep.subr.mxu0 0.0
    %413 = vmatpush2.msra.mxu0 0.0
    %414 = vmatprep.subr.mxu0 0.0
    %415 = vmatpush2.msra.mxu0 0.0
    %416 = vmatprep.subr.mxu0 0.0
    %417 = vmatpush2.msra.mxu0 0.0
    %418 = vmatprep.subr.mxu0 0.0
    %419 = vmatpush2.msra.mxu0 0.0
    %420 = vmatprep.subr.mxu0 0.0
    %421 = vmatpush2.msra.mxu0 0.0
    %422 = vmatprep.subr.mxu0 0.0
    %423 = vmatpush2.msra.mxu0 0.0
    %424 = vmatprep.subr.mxu0 0.0
    %425 = vmatpush2.msra.mxu0 0.0
    %426 = vmatprep.subr.mxu0 0.0
    %427 = vmatpush2.msra.mxu0 0.0
    %428 = vmatprep.subr.mxu0 0.0
    %429 = vmatpush2.msra.mxu0 0.0
    %430 = vmatprep.mubr.f32.mxu0 0.0
    %431 = vmatmul.mubr.f32.gmra.mxu0 %v358
    %v432 = vpop.f32.mrf.mxu0
    %v433 = vadd.f32 0.0, %v432
    %v434 = vpop.f32.mrf.mxu0
    %v435 = vadd.f32 0.0, %v434
    %436 = vdwg.mxu0
    %v437 = vadd.f32 %v340, %v433
    %v438 = vadd.f32 %v341, %v435
    %s439 = scalar_lea.vmem %s1, 32
    %v440 = vld [vmem:[%s439] sm:$0xff]
    %441 = vrot.lane.b32.xlu0 %v24, 111
    %v442 = vpop.permute.xlu0 %441
    %443 = vrot.lane.b32.xlu0 %v62, 111
    %v444 = vpop.permute.xlu0 %443
    %445 = vrot.lane.b32.xlu0 %v25, 111
    %v446 = vpop.permute.xlu0 %445
    %vm447 = vcmask 908288
    %v448 = vsel %vm447, %v442, %v444
    %v449 = vsel %vm447, %v444, %v446
    %v451 = vsel %vm79, %v440, 0
    %v453 = vsel %vm83, %v448, 0
    %v455 = vsel %vm83, %v449, 0
    %457 = vmatprep.subr.mxu0 0.0
    %458 = vmatpush1.msra.mxu0 0.0
    %459 = vmatprep.subr.mxu0 0.0
    %460 = vmatpush1.msra.mxu0 0.0
    %461 = vmatprep.subr.mxu0 0.0
    %462 = vmatpush1.msra.mxu0 0.0
    %463 = vmatprep.subr.mxu0 0.0
    %464 = vmatpush1.msra.mxu0 0.0
    %465 = vmatprep.subr.mxu0 0.0
    %466 = vmatpush1.msra.mxu0 0.0
    %467 = vmatprep.subr.mxu0 0.0
    %468 = vmatpush1.msra.mxu0 0.0
    %469 = vmatprep.subr.mxu0 0.0
    %470 = vmatpush1.msra.mxu0 0.0
    %471 = vmatprep.subr.mxu0 0.0
    %472 = vmatpush1.msra.mxu0 0.0
    %473 = vmatprep.subr.mxu0 0.0
    %474 = vmatpush1.msra.mxu0 0.0
    %475 = vmatprep.subr.mxu0 0.0
    %476 = vmatpush1.msra.mxu0 0.0
    %477 = vmatprep.subr.mxu0 0.0
    %478 = vmatpush1.msra.mxu0 0.0
    %479 = vmatprep.subr.mxu0 0.0
    %480 = vmatpush1.msra.mxu0 0.0
    %481 = vmatprep.subr.mxu0 0.0
    %482 = vmatpush1.msra.mxu0 0.0
    %483 = vmatprep.subr.mxu0 0.0
    %484 = vmatpush1.msra.mxu0 0.0
    %485 = vmatprep.subr.mxu0 0.0
    %486 = vmatpush1.msra.mxu0 0.0
    %487 = vmatprep.subr.mxu0 %v455
    %488 = vmatpush1.msra.mxu0 %v453
    %489 = vmatprep.subr.mxu0 0.0
    %490 = vmatpush2.msra.mxu0 0.0
    %491 = vmatprep.subr.mxu0 0.0
    %492 = vmatpush2.msra.mxu0 0.0
    %493 = vmatprep.subr.mxu0 0.0
    %494 = vmatpush2.msra.mxu0 0.0
    %495 = vmatprep.subr.mxu0 0.0
    %496 = vmatpush2.msra.mxu0 0.0
    %497 = vmatprep.subr.mxu0 0.0
    %498 = vmatpush2.msra.mxu0 0.0
    %499 = vmatprep.subr.mxu0 0.0
    %500 = vmatpush2.msra.mxu0 0.0
    %501 = vmatprep.subr.mxu0 0.0
    %502 = vmatpush2.msra.mxu0 0.0
    %503 = vmatprep.subr.mxu0 0.0
    %504 = vmatpush2.msra.mxu0 0.0
    %505 = vmatprep.subr.mxu0 0.0
    %506 = vmatpush2.msra.mxu0 0.0
    %507 = vmatprep.subr.mxu0 0.0
    %508 = vmatpush2.msra.mxu0 0.0
    %509 = vmatprep.subr.mxu0 0.0
    %510 = vmatpush2.msra.mxu0 0.0
    %511 = vmatprep.subr.mxu0 0.0
    %512 = vmatpush2.msra.mxu0 0.0
    %513 = vmatprep.subr.mxu0 0.0
    %514 = vmatpush2.msra.mxu0 0.0
    %515 = vmatprep.subr.mxu0 0.0
    %516 = vmatpush2.msra.mxu0 0.0
    %517 = vmatprep.subr.mxu0 0.0
    %518 = vmatpush2.msra.mxu0 0.0
    %519 = vmatprep.subr.mxu0 0.0
    %520 = vmatpush2.msra.mxu0 0.0
    %521 = vmatprep.mubr.f32.mxu0 0.0
    %522 = vmatmul.mubr.f32.gmra.mxu0 %v451
    %v523 = vpop.f32.mrf.mxu0
    %v524 = vadd.f32 0.0, %v523
    %v525 = vpop.f32.mrf.mxu0
    %v526 = vadd.f32 0.0, %v525
    %527 = vdwg.mxu0
    %v528 = vadd.f32 %v437, %v524
    %v529 = vadd.f32 %v438, %v526
    %530 = vrot.lane.b32.xlu0 %v24, 110
    %v531 = vpop.permute.xlu0 %530
    %532 = vrot.lane.b32.xlu0 %v62, 110
    %v533 = vpop.permute.xlu0 %532
    %534 = vrot.lane.b32.xlu0 %v25, 110
    %v535 = vpop.permute.xlu0 %534
    %vm536 = vcmask 900096
    %v537 = vsel %vm536, %v531, %v533
    %v538 = vsel %vm536, %v533, %v535
    %v541 = vsel %vm243, 0.0, %v537
    %v542 = vsel %vm244, 0.0, %v538
    %s543 = scalar_lea.vmem %s1, 40
    %v544 = vld [vmem:[%s543] sm:$0xff]
    %v546 = vsel %vm79, %v544, 0
    %v549 = vsel %vm83, %v541, 0
    %v552 = vsel %vm83, %v542, 0
    %554 = vmatprep.subr.mxu0 0.0
    %555 = vmatpush1.msra.mxu0 0.0
    %556 = vmatprep.subr.mxu0 0.0
    %557 = vmatpush1.msra.mxu0 0.0
    %558 = vmatprep.subr.mxu0 0.0
    %559 = vmatpush1.msra.mxu0 0.0
    %560 = vmatprep.subr.mxu0 0.0
    %561 = vmatpush1.msra.mxu0 0.0
    %562 = vmatprep.subr.mxu0 0.0
    %563 = vmatpush1.msra.mxu0 0.0
    %564 = vmatprep.subr.mxu0 0.0
    %565 = vmatpush1.msra.mxu0 0.0
    %566 = vmatprep.subr.mxu0 0.0
    %567 = vmatpush1.msra.mxu0 0.0
    %568 = vmatprep.subr.mxu0 0.0
    %569 = vmatpush1.msra.mxu0 0.0
    %570 = vmatprep.subr.mxu0 0.0
    %571 = vmatpush1.msra.mxu0 0.0
    %572 = vmatprep.subr.mxu0 0.0
    %573 = vmatpush1.msra.mxu0 0.0
    %574 = vmatprep.subr.mxu0 0.0
    %575 = vmatpush1.msra.mxu0 0.0
    %576 = vmatprep.subr.mxu0 0.0
    %577 = vmatpush1.msra.mxu0 0.0
    %578 = vmatprep.subr.mxu0 0.0
    %579 = vmatpush1.msra.mxu0 0.0
    %580 = vmatprep.subr.mxu0 0.0
    %581 = vmatpush1.msra.mxu0 0.0
    %582 = vmatprep.subr.mxu0 0.0
    %583 = vmatpush1.msra.mxu0 0.0
    %584 = vmatprep.subr.mxu0 %v552
    %585 = vmatpush1.msra.mxu0 %v549
    %586 = vmatprep.subr.mxu0 0.0
    %587 = vmatpush2.msra.mxu0 0.0
    %588 = vmatprep.subr.mxu0 0.0
    %589 = vmatpush2.msra.mxu0 0.0
    %590 = vmatprep.subr.mxu0 0.0
    %591 = vmatpush2.msra.mxu0 0.0
    %592 = vmatprep.subr.mxu0 0.0
    %593 = vmatpush2.msra.mxu0 0.0
    %594 = vmatprep.subr.mxu0 0.0
    %595 = vmatpush2.msra.mxu0 0.0
    %596 = vmatprep.subr.mxu0 0.0
    %597 = vmatpush2.msra.mxu0 0.0
    %598 = vmatprep.subr.mxu0 0.0
    %599 = vmatpush2.msra.mxu0 0.0
    %600 = vmatprep.subr.mxu0 0.0
    %601 = vmatpush2.msra.mxu0 0.0
    %602 = vmatprep.subr.mxu0 0.0
    %603 = vmatpush2.msra.mxu0 0.0
    %604 = vmatprep.subr.mxu0 0.0
    %605 = vmatpush2.msra.mxu0 0.0
    %606 = vmatprep.subr.mxu0 0.0
    %607 = vmatpush2.msra.mxu0 0.0
    %608 = vmatprep.subr.mxu0 0.0
    %609 = vmatpush2.msra.mxu0 0.0
    %610 = vmatprep.subr.mxu0 0.0
    %611 = vmatpush2.msra.mxu0 0.0
    %612 = vmatprep.subr.mxu0 0.0
    %613 = vmatpush2.msra.mxu0 0.0
    %614 = vmatprep.subr.mxu0 0.0
    %615 = vmatpush2.msra.mxu0 0.0
    %616 = vmatprep.subr.mxu0 0.0
    %617 = vmatpush2.msra.mxu0 0.0
    %618 = vmatprep.mubr.f32.mxu0 0.0
    %619 = vmatmul.mubr.f32.gmra.mxu0 %v546
    %v620 = vpop.f32.mrf.mxu0
    %v621 = vadd.f32 0.0, %v620
    %v622 = vpop.f32.mrf.mxu0
    %v623 = vadd.f32 0.0, %v622
    %624 = vdwg.mxu0
    %v625 = vadd.f32 %v528, %v621
    %v626 = vadd.f32 %v529, %v623
    %627 = vrot.lane.b32.xlu0 %v24, 96
    %v628 = vpop.permute.xlu0 %627
    %629 = vrot.lane.b32.xlu0 %v62, 96
    %v630 = vpop.permute.xlu0 %629
    %631 = vrot.lane.b32.xlu0 %v25, 96
    %v632 = vpop.permute.xlu0 %631
    %vm633 = vcmask 785408
    %v634 = vsel %vm633, %v628, %v630
    %v635 = vsel %vm633, %v630, %v632
    %v638 = vsel %vm59, 0.0, %v634
    %v639 = vsel %vm60, 0.0, %v635
    %s640 = scalar_lea.vmem %s1, 48
    %v641 = vld [vmem:[%s640] sm:$0xff]
    %v643 = vsel %vm79, %v641, 0
    %v646 = vsel %vm83, %v638, 0
    %v649 = vsel %vm83, %v639, 0
    %651 = vmatprep.subr.mxu0 0.0
    %652 = vmatpush1.msra.mxu0 0.0
    %653 = vmatprep.subr.mxu0 0.0
    %654 = vmatpush1.msra.mxu0 0.0
    %655 = vmatprep.subr.mxu0 0.0
    %656 = vmatpush1.msra.mxu0 0.0
    %657 = vmatprep.subr.mxu0 0.0
    %658 = vmatpush1.msra.mxu0 0.0
    %659 = vmatprep.subr.mxu0 0.0
    %660 = vmatpush1.msra.mxu0 0.0
    %661 = vmatprep.subr.mxu0 0.0
    %662 = vmatpush1.msra.mxu0 0.0
    %663 = vmatprep.subr.mxu0 0.0
    %664 = vmatpush1.msra.mxu0 0.0
    %665 = vmatprep.subr.mxu0 0.0
    %666 = vmatpush1.msra.mxu0 0.0
    %667 = vmatprep.subr.mxu0 0.0
    %668 = vmatpush1.msra.mxu0 0.0
    %669 = vmatprep.subr.mxu0 0.0
    %670 = vmatpush1.msra.mxu0 0.0
    %671 = vmatprep.subr.mxu0 0.0
    %672 = vmatpush1.msra.mxu0 0.0
    %673 = vmatprep.subr.mxu0 0.0
    %674 = vmatpush1.msra.mxu0 0.0
    %675 = vmatprep.subr.mxu0 0.0
    %676 = vmatpush1.msra.mxu0 0.0
    %677 = vmatprep.subr.mxu0 0.0
    %678 = vmatpush1.msra.mxu0 0.0
    %679 = vmatprep.subr.mxu0 0.0
    %680 = vmatpush1.msra.mxu0 0.0
    %681 = vmatprep.subr.mxu0 %v649
    %682 = vmatpush1.msra.mxu0 %v646
    %683 = vmatprep.subr.mxu0 0.0
    %684 = vmatpush2.msra.mxu0 0.0
    %685 = vmatprep.subr.mxu0 0.0
    %686 = vmatpush2.msra.mxu0 0.0
    %687 = vmatprep.subr.mxu0 0.0
    %688 = vmatpush2.msra.mxu0 0.0
    %689 = vmatprep.subr.mxu0 0.0
    %690 = vmatpush2.msra.mxu0 0.0
    %691 = vmatprep.subr.mxu0 0.0
    %692 = vmatpush2.msra.mxu0 0.0
    %693 = vmatprep.subr.mxu0 0.0
    %694 = vmatpush2.msra.mxu0 0.0
    %695 = vmatprep.subr.mxu0 0.0
    %696 = vmatpush2.msra.mxu0 0.0
    %697 = vmatprep.subr.mxu0 0.0
    %698 = vmatpush2.msra.mxu0 0.0
    %699 = vmatprep.subr.mxu0 0.0
    %700 = vmatpush2.msra.mxu0 0.0
    %701 = vmatprep.subr.mxu0 0.0
    %702 = vmatpush2.msra.mxu0 0.0
    %703 = vmatprep.subr.mxu0 0.0
    %704 = vmatpush2.msra.mxu0 0.0
    %705 = vmatprep.subr.mxu0 0.0
    %706 = vmatpush2.msra.mxu0 0.0
    %707 = vmatprep.subr.mxu0 0.0
    %708 = vmatpush2.msra.mxu0 0.0
    %709 = vmatprep.subr.mxu0 0.0
    %710 = vmatpush2.msra.mxu0 0.0
    %711 = vmatprep.subr.mxu0 0.0
    %712 = vmatpush2.msra.mxu0 0.0
    %713 = vmatprep.subr.mxu0 0.0
    %714 = vmatpush2.msra.mxu0 0.0
    %715 = vmatprep.mubr.f32.mxu0 0.0
    %716 = vmatmul.mubr.f32.gmra.mxu0 %v643
    %v717 = vpop.f32.mrf.mxu0
    %v718 = vadd.f32 0.0, %v717
    %v719 = vpop.f32.mrf.mxu0
    %v720 = vadd.f32 0.0, %v719
    %721 = vdwg.mxu0
    %v722 = vadd.f32 %v625, %v718
    %v723 = vadd.f32 %v626, %v720
    %s724 = scalar_lea.vmem %s1, 56
    %v725 = vld [vmem:[%s724] sm:$0xff]
    %726 = vrot.lane.b32.xlu0 %v24, 95
    %v727 = vpop.permute.xlu0 %726
    %728 = vrot.lane.b32.xlu0 %v62, 95
    %v729 = vpop.permute.xlu0 %728
    %730 = vrot.lane.b32.xlu0 %v25, 95
    %v731 = vpop.permute.xlu0 %730
    %vm732 = vcmask 777216
    %v733 = vsel %vm732, %v727, %v729
    %v734 = vsel %vm732, %v729, %v731
    %v736 = vsel %vm79, %v725, 0
    %v738 = vsel %vm83, %v733, 0
    %v740 = vsel %vm83, %v734, 0
    %742 = vmatprep.subr.mxu0 0.0
    %743 = vmatpush1.msra.mxu0 0.0
    %744 = vmatprep.subr.mxu0 0.0
    %745 = vmatpush1.msra.mxu0 0.0
    %746 = vmatprep.subr.mxu0 0.0
    %747 = vmatpush1.msra.mxu0 0.0
    %748 = vmatprep.subr.mxu0 0.0
    %749 = vmatpush1.msra.mxu0 0.0
    %750 = vmatprep.subr.mxu0 0.0
    %751 = vmatpush1.msra.mxu0 0.0
    %752 = vmatprep.subr.mxu0 0.0
    %753 = vmatpush1.msra.mxu0 0.0
    %754 = vmatprep.subr.mxu0 0.0
    %755 = vmatpush1.msra.mxu0 0.0
    %756 = vmatprep.subr.mxu0 0.0
    %757 = vmatpush1.msra.mxu0 0.0
    %758 = vmatprep.subr.mxu0 0.0
    %759 = vmatpush1.msra.mxu0 0.0
    %760 = vmatprep.subr.mxu0 0.0
    %761 = vmatpush1.msra.mxu0 0.0
    %762 = vmatprep.subr.mxu0 0.0
    %763 = vmatpush1.msra.mxu0 0.0
    %764 = vmatprep.subr.mxu0 0.0
    %765 = vmatpush1.msra.mxu0 0.0
    %766 = vmatprep.subr.mxu0 0.0
    %767 = vmatpush1.msra.mxu0 0.0
    %768 = vmatprep.subr.mxu0 0.0
    %769 = vmatpush1.msra.mxu0 0.0
    %770 = vmatprep.subr.mxu0 0.0
    %771 = vmatpush1.msra.mxu0 0.0
    %772 = vmatprep.subr.mxu0 %v740
    %773 = vmatpush1.msra.mxu0 %v738
    %774 = vmatprep.subr.mxu0 0.0
    %775 = vmatpush2.msra.mxu0 0.0
    %776 = vmatprep.subr.mxu0 0.0
    %777 = vmatpush2.msra.mxu0 0.0
    %778 = vmatprep.subr.mxu0 0.0
    %779 = vmatpush2.msra.mxu0 0.0
    %780 = vmatprep.subr.mxu0 0.0
    %781 = vmatpush2.msra.mxu0 0.0
    %782 = vmatprep.subr.mxu0 0.0
    %783 = vmatpush2.msra.mxu0 0.0
    %784 = vmatprep.subr.mxu0 0.0
    %785 = vmatpush2.msra.mxu0 0.0
    %786 = vmatprep.subr.mxu0 0.0
    %787 = vmatpush2.msra.mxu0 0.0
    %788 = vmatprep.subr.mxu0 0.0
    %789 = vmatpush2.msra.mxu0 0.0
    %790 = vmatprep.subr.mxu0 0.0
    %791 = vmatpush2.msra.mxu0 0.0
    %792 = vmatprep.subr.mxu0 0.0
    %793 = vmatpush2.msra.mxu0 0.0
    %794 = vmatprep.subr.mxu0 0.0
    %795 = vmatpush2.msra.mxu0 0.0
    %796 = vmatprep.subr.mxu0 0.0
    %797 = vmatpush2.msra.mxu0 0.0
    %798 = vmatprep.subr.mxu0 0.0
    %799 = vmatpush2.msra.mxu0 0.0
    %800 = vmatprep.subr.mxu0 0.0
    %801 = vmatpush2.msra.mxu0 0.0
    %802 = vmatprep.subr.mxu0 0.0
    %803 = vmatpush2.msra.mxu0 0.0
    %804 = vmatprep.subr.mxu0 0.0
    %805 = vmatpush2.msra.mxu0 0.0
    %806 = vmatprep.mubr.f32.mxu0 0.0
    %807 = vmatmul.mubr.f32.gmra.mxu0 %v736
    %v808 = vpop.f32.mrf.mxu0
    %v809 = vadd.f32 0.0, %v808
    %v810 = vpop.f32.mrf.mxu0
    %v811 = vadd.f32 0.0, %v810
    %812 = vdwg.mxu0
    %v813 = vadd.f32 %v722, %v809
    %v814 = vadd.f32 %v723, %v811
    %815 = vrot.lane.b32.xlu0 %v24, 94
    %v816 = vpop.permute.xlu0 %815
    %817 = vrot.lane.b32.xlu0 %v62, 94
    %v818 = vpop.permute.xlu0 %817
    %819 = vrot.lane.b32.xlu0 %v25, 94
    %v820 = vpop.permute.xlu0 %819
    %vm821 = vcmask 769024
    %v822 = vsel %vm821, %v816, %v818
    %v823 = vsel %vm821, %v818, %v820
    %v826 = vsel %vm243, 0.0, %v822
    %v827 = vsel %vm244, 0.0, %v823
    %s828 = scalar_lea.vmem %s1, 64
    %v829 = vld [vmem:[%s828] sm:$0xff]
    %v831 = vsel %vm79, %v829, 0
    %v834 = vsel %vm83, %v826, 0
    %v837 = vsel %vm83, %v827, 0
    %839 = vmatprep.subr.mxu0 0.0
    %840 = vmatpush1.msra.mxu0 0.0
    %841 = vmatprep.subr.mxu0 0.0
    %842 = vmatpush1.msra.mxu0 0.0
    %843 = vmatprep.subr.mxu0 0.0
    %844 = vmatpush1.msra.mxu0 0.0
    %845 = vmatprep.subr.mxu0 0.0
    %846 = vmatpush1.msra.mxu0 0.0
    %847 = vmatprep.subr.mxu0 0.0
    %848 = vmatpush1.msra.mxu0 0.0
    %849 = vmatprep.subr.mxu0 0.0
    %850 = vmatpush1.msra.mxu0 0.0
    %851 = vmatprep.subr.mxu0 0.0
    %852 = vmatpush1.msra.mxu0 0.0
    %853 = vmatprep.subr.mxu0 0.0
    %854 = vmatpush1.msra.mxu0 0.0
    %855 = vmatprep.subr.mxu0 0.0
    %856 = vmatpush1.msra.mxu0 0.0
    %857 = vmatprep.subr.mxu0 0.0
    %858 = vmatpush1.msra.mxu0 0.0
    %859 = vmatprep.subr.mxu0 0.0
    %860 = vmatpush1.msra.mxu0 0.0
    %861 = vmatprep.subr.mxu0 0.0
    %862 = vmatpush1.msra.mxu0 0.0
    %863 = vmatprep.subr.mxu0 0.0
    %864 = vmatpush1.msra.mxu0 0.0
    %865 = vmatprep.subr.mxu0 0.0
    %866 = vmatpush1.msra.mxu0 0.0
    %867 = vmatprep.subr.mxu0 0.0
    %868 = vmatpush1.msra.mxu0 0.0
    %869 = vmatprep.subr.mxu0 %v837
    %870 = vmatpush1.msra.mxu0 %v834
    %871 = vmatprep.subr.mxu0 0.0
    %872 = vmatpush2.msra.mxu0 0.0
    %873 = vmatprep.subr.mxu0 0.0
    %874 = vmatpush2.msra.mxu0 0.0
    %875 = vmatprep.subr.mxu0 0.0
    %876 = vmatpush2.msra.mxu0 0.0
    %877 = vmatprep.subr.mxu0 0.0
    %878 = vmatpush2.msra.mxu0 0.0
    %879 = vmatprep.subr.mxu0 0.0
    %880 = vmatpush2.msra.mxu0 0.0
    %881 = vmatprep.subr.mxu0 0.0
    %882 = vmatpush2.msra.mxu0 0.0
    %883 = vmatprep.subr.mxu0 0.0
    %884 = vmatpush2.msra.mxu0 0.0
    %885 = vmatprep.subr.mxu0 0.0
    %886 = vmatpush2.msra.mxu0 0.0
    %887 = vmatprep.subr.mxu0 0.0
    %888 = vmatpush2.msra.mxu0 0.0
    %889 = vmatprep.subr.mxu0 0.0
    %890 = vmatpush2.msra.mxu0 0.0
    %891 = vmatprep.subr.mxu0 0.0
    %892 = vmatpush2.msra.mxu0 0.0
    %893 = vmatprep.subr.mxu0 0.0
    %894 = vmatpush2.msra.mxu0 0.0
    %895 = vmatprep.subr.mxu0 0.0
    %896 = vmatpush2.msra.mxu0 0.0
    %897 = vmatprep.subr.mxu0 0.0
    %898 = vmatpush2.msra.mxu0 0.0
    %899 = vmatprep.subr.mxu0 0.0
    %900 = vmatpush2.msra.mxu0 0.0
    %901 = vmatprep.subr.mxu0 0.0
    %902 = vmatpush2.msra.mxu0 0.0
    %903 = vmatprep.mubr.f32.mxu0 0.0
    %904 = vmatmul.mubr.f32.gmra.mxu0 %v831
    %v905 = vpop.f32.mrf.mxu0
    %v906 = vadd.f32 0.0, %v905
    %v907 = vpop.f32.mrf.mxu0
    %v908 = vadd.f32 0.0, %v907
    %909 = vdwg.mxu0
    %v910 = vadd.f32 %v813, %v906
    %v911 = vadd.f32 %v814, %v908
    %v913 = vcombine.high %v26, %v26
    %v915 = vsel %vm59, 0.0, %v26
    %v916 = vsel %vm60, 0.0, %v913
    %918 = vrot.lane.b32.xlu0 %v26, 127
    %v919 = vpop.permute.xlu0 %918
    %920 = vrot.lane.b32.xlu0 %v913, 127
    %v921 = vpop.permute.xlu0 %920
    %922 = vrot.lane.b32.xlu0 %v27, 127
    %v923 = vpop.permute.xlu0 %922
    %v924 = vsel %vm76, %v919, %v921
    %v925 = vsel %vm76, %v921, %v923
    %v926 = vsel %vm83, %v924, 0
    %v928 = vsel %vm83, %v925, 0
    %930 = vmatprep.subr.mxu0 0.0
    %931 = vmatpush1.msra.mxu0 0.0
    %932 = vmatprep.subr.mxu0 0.0
    %933 = vmatpush1.msra.mxu0 0.0
    %934 = vmatprep.subr.mxu0 0.0
    %935 = vmatpush1.msra.mxu0 0.0
    %936 = vmatprep.subr.mxu0 0.0
    %937 = vmatpush1.msra.mxu0 0.0
    %938 = vmatprep.subr.mxu0 0.0
    %939 = vmatpush1.msra.mxu0 0.0
    %940 = vmatprep.subr.mxu0 0.0
    %941 = vmatpush1.msra.mxu0 0.0
    %942 = vmatprep.subr.mxu0 0.0
    %943 = vmatpush1.msra.mxu0 0.0
    %944 = vmatprep.subr.mxu0 0.0
    %945 = vmatpush1.msra.mxu0 0.0
    %946 = vmatprep.subr.mxu0 0.0
    %947 = vmatpush1.msra.mxu0 0.0
    %948 = vmatprep.subr.mxu0 0.0
    %949 = vmatpush1.msra.mxu0 0.0
    %950 = vmatprep.subr.mxu0 0.0
    %951 = vmatpush1.msra.mxu0 0.0
    %952 = vmatprep.subr.mxu0 0.0
    %953 = vmatpush1.msra.mxu0 0.0
    %954 = vmatprep.subr.mxu0 0.0
    %955 = vmatpush1.msra.mxu0 0.0
    %956 = vmatprep.subr.mxu0 0.0
    %957 = vmatpush1.msra.mxu0 0.0
    %958 = vmatprep.subr.mxu0 0.0
    %959 = vmatpush1.msra.mxu0 0.0
    %960 = vmatprep.subr.mxu0 %v928
    %961 = vmatpush1.msra.mxu0 %v926
    %962 = vmatprep.subr.mxu0 0.0
    %963 = vmatpush2.msra.mxu0 0.0
    %964 = vmatprep.subr.mxu0 0.0
    %965 = vmatpush2.msra.mxu0 0.0
    %966 = vmatprep.subr.mxu0 0.0
    %967 = vmatpush2.msra.mxu0 0.0
    %968 = vmatprep.subr.mxu0 0.0
    %969 = vmatpush2.msra.mxu0 0.0
    %970 = vmatprep.subr.mxu0 0.0
    %971 = vmatpush2.msra.mxu0 0.0
    %972 = vmatprep.subr.mxu0 0.0
    %973 = vmatpush2.msra.mxu0 0.0
    %974 = vmatprep.subr.mxu0 0.0
    %975 = vmatpush2.msra.mxu0 0.0
    %976 = vmatprep.subr.mxu0 0.0
    %977 = vmatpush2.msra.mxu0 0.0
    %978 = vmatprep.subr.mxu0 0.0
    %979 = vmatpush2.msra.mxu0 0.0
    %980 = vmatprep.subr.mxu0 0.0
    %981 = vmatpush2.msra.mxu0 0.0
    %982 = vmatprep.subr.mxu0 0.0
    %983 = vmatpush2.msra.mxu0 0.0
    %984 = vmatprep.subr.mxu0 0.0
    %985 = vmatpush2.msra.mxu0 0.0
    %986 = vmatprep.subr.mxu0 0.0
    %987 = vmatpush2.msra.mxu0 0.0
    %988 = vmatprep.subr.mxu0 0.0
    %989 = vmatpush2.msra.mxu0 0.0
    %990 = vmatprep.subr.mxu0 0.0
    %991 = vmatpush2.msra.mxu0 0.0
    %992 = vmatprep.subr.mxu0 0.0
    %993 = vmatpush2.msra.mxu0 0.0
    %994 = vmatprep.mubr.f32.mxu0 0.0
    %995 = vmatmul.mubr.f32.gmra.mxu0 %v81
    %v996 = vpop.f32.mrf.mxu0
    %v997 = vadd.f32 0.0, %v996
    %v998 = vpop.f32.mrf.mxu0
    %v999 = vadd.f32 0.0, %v998
    %1000 = vdwg.mxu0
    %v1002 = vsel %vm83, %v915, 0
    %v1005 = vsel %vm83, %v916, 0
    %1007 = vmatprep.subr.mxu0 0.0
    %1008 = vmatpush1.msra.mxu0 0.0
    %1009 = vmatprep.subr.mxu0 0.0
    %1010 = vmatpush1.msra.mxu0 0.0
    %1011 = vmatprep.subr.mxu0 0.0
    %1012 = vmatpush1.msra.mxu0 0.0
    %1013 = vmatprep.subr.mxu0 0.0
    %1014 = vmatpush1.msra.mxu0 0.0
    %1015 = vmatprep.subr.mxu0 0.0
    %1016 = vmatpush1.msra.mxu0 0.0
    %1017 = vmatprep.subr.mxu0 0.0
    %1018 = vmatpush1.msra.mxu0 0.0
    %1019 = vmatprep.subr.mxu0 0.0
    %1020 = vmatpush1.msra.mxu0 0.0
    %1021 = vmatprep.subr.mxu0 0.0
    %1022 = vmatpush1.msra.mxu0 0.0
    %1023 = vmatprep.subr.mxu0 0.0
    %1024 = vmatpush1.msra.mxu0 0.0
    %1025 = vmatprep.subr.mxu0 0.0
    %1026 = vmatpush1.msra.mxu0 0.0
    %1027 = vmatprep.subr.mxu0 0.0
    %1028 = vmatpush1.msra.mxu0 0.0
    %1029 = vmatprep.subr.mxu0 0.0
    %1030 = vmatpush1.msra.mxu0 0.0
    %1031 = vmatprep.subr.mxu0 0.0
    %1032 = vmatpush1.msra.mxu0 0.0
    %1033 = vmatprep.subr.mxu0 0.0
    %1034 = vmatpush1.msra.mxu0 0.0
    %1035 = vmatprep.subr.mxu0 0.0
    %1036 = vmatpush1.msra.mxu0 0.0
    %1037 = vmatprep.subr.mxu0 %v1005
    %1038 = vmatpush1.msra.mxu0 %v1002
    %1039 = vmatprep.subr.mxu0 0.0
    %1040 = vmatpush2.msra.mxu0 0.0
    %1041 = vmatprep.subr.mxu0 0.0
    %1042 = vmatpush2.msra.mxu0 0.0
    %1043 = vmatprep.subr.mxu0 0.0
    %1044 = vmatpush2.msra.mxu0 0.0
    %1045 = vmatprep.subr.mxu0 0.0
    %1046 = vmatpush2.msra.mxu0 0.0
    %1047 = vmatprep.subr.mxu0 0.0
    %1048 = vmatpush2.msra.mxu0 0.0
    %1049 = vmatprep.subr.mxu0 0.0
    %1050 = vmatpush2.msra.mxu0 0.0
    %1051 = vmatprep.subr.mxu0 0.0
    %1052 = vmatpush2.msra.mxu0 0.0
    %1053 = vmatprep.subr.mxu0 0.0
    %1054 = vmatpush2.msra.mxu0 0.0
    %1055 = vmatprep.subr.mxu0 0.0
    %1056 = vmatpush2.msra.mxu0 0.0
    %1057 = vmatprep.subr.mxu0 0.0
    %1058 = vmatpush2.msra.mxu0 0.0
    %1059 = vmatprep.subr.mxu0 0.0
    %1060 = vmatpush2.msra.mxu0 0.0
    %1061 = vmatprep.subr.mxu0 0.0
    %1062 = vmatpush2.msra.mxu0 0.0
    %1063 = vmatprep.subr.mxu0 0.0
    %1064 = vmatpush2.msra.mxu0 0.0
    %1065 = vmatprep.subr.mxu0 0.0
    %1066 = vmatpush2.msra.mxu0 0.0
    %1067 = vmatprep.subr.mxu0 0.0
    %1068 = vmatpush2.msra.mxu0 0.0
    %1069 = vmatprep.subr.mxu0 0.0
    %1070 = vmatpush2.msra.mxu0 0.0
    %1071 = vmatprep.mubr.f32.mxu0 0.0
    %1072 = vmatmul.mubr.f32.gmra.mxu0 %v160
    %v1073 = vpop.f32.mrf.mxu0
    %v1074 = vadd.f32 %v997, %v1073
    %v1075 = vpop.f32.mrf.mxu0
    %v1076 = vadd.f32 %v999, %v1075
    %1077 = vdwg.mxu0
    %1078 = vrot.lane.b32.xlu0 %v26, 126
    %v1079 = vpop.permute.xlu0 %1078
    %1080 = vrot.lane.b32.xlu0 %v913, 126
    %v1081 = vpop.permute.xlu0 %1080
    %1082 = vrot.lane.b32.xlu0 %v27, 126
    %v1083 = vpop.permute.xlu0 %1082
    %v1084 = vsel %vm251, %v1079, %v1081
    %v1085 = vsel %vm251, %v1081, %v1083
    %v1088 = vsel %vm243, 0.0, %v1084
    %v1089 = vsel %vm244, 0.0, %v1085
    %v1091 = vsel %vm83, %v1088, 0
    %v1094 = vsel %vm83, %v1089, 0
    %1096 = vmatprep.subr.mxu0 0.0
    %1097 = vmatpush1.msra.mxu0 0.0
    %1098 = vmatprep.subr.mxu0 0.0
    %1099 = vmatpush1.msra.mxu0 0.0
    %1100 = vmatprep.subr.mxu0 0.0
    %1101 = vmatpush1.msra.mxu0 0.0
    %1102 = vmatprep.subr.mxu0 0.0
    %1103 = vmatpush1.msra.mxu0 0.0
    %1104 = vmatprep.subr.mxu0 0.0
    %1105 = vmatpush1.msra.mxu0 0.0
    %1106 = vmatprep.subr.mxu0 0.0
    %1107 = vmatpush1.msra.mxu0 0.0
    %1108 = vmatprep.subr.mxu0 0.0
    %1109 = vmatpush1.msra.mxu0 0.0
    %1110 = vmatprep.subr.mxu0 0.0
    %1111 = vmatpush1.msra.mxu0 0.0
    %1112 = vmatprep.subr.mxu0 0.0
    %1113 = vmatpush1.msra.mxu0 0.0
    %1114 = vmatprep.subr.mxu0 0.0
    %1115 = vmatpush1.msra.mxu0 0.0
    %1116 = vmatprep.subr.mxu0 0.0
    %1117 = vmatpush1.msra.mxu0 0.0
    %1118 = vmatprep.subr.mxu0 0.0
    %1119 = vmatpush1.msra.mxu0 0.0
    %1120 = vmatprep.subr.mxu0 0.0
    %1121 = vmatpush1.msra.mxu0 0.0
    %1122 = vmatprep.subr.mxu0 0.0
    %1123 = vmatpush1.msra.mxu0 0.0
    %1124 = vmatprep.subr.mxu0 0.0
    %1125 = vmatpush1.msra.mxu0 0.0
    %1126 = vmatprep.subr.mxu0 %v1094
    %1127 = vmatpush1.msra.mxu0 %v1091
    %1128 = vmatprep.subr.mxu0 0.0
    %1129 = vmatpush2.msra.mxu0 0.0
    %1130 = vmatprep.subr.mxu0 0.0
    %1131 = vmatpush2.msra.mxu0 0.0
    %1132 = vmatprep.subr.mxu0 0.0
    %1133 = vmatpush2.msra.mxu0 0.0
    %1134 = vmatprep.subr.mxu0 0.0
    %1135 = vmatpush2.msra.mxu0 0.0
    %1136 = vmatprep.subr.mxu0 0.0
    %1137 = vmatpush2.msra.mxu0 0.0
    %1138 = vmatprep.subr.mxu0 0.0
    %1139 = vmatpush2.msra.mxu0 0.0
    %1140 = vmatprep.subr.mxu0 0.0
    %1141 = vmatpush2.msra.mxu0 0.0
    %1142 = vmatprep.subr.mxu0 0.0
    %1143 = vmatpush2.msra.mxu0 0.0
    %1144 = vmatprep.subr.mxu0 0.0
    %1145 = vmatpush2.msra.mxu0 0.0
    %1146 = vmatprep.subr.mxu0 0.0
    %1147 = vmatpush2.msra.mxu0 0.0
    %1148 = vmatprep.subr.mxu0 0.0
    %1149 = vmatpush2.msra.mxu0 0.0
    %1150 = vmatprep.subr.mxu0 0.0
    %1151 = vmatpush2.msra.mxu0 0.0
    %1152 = vmatprep.subr.mxu0 0.0
    %1153 = vmatpush2.msra.mxu0 0.0
    %1154 = vmatprep.subr.mxu0 0.0
    %1155 = vmatpush2.msra.mxu0 0.0
    %1156 = vmatprep.subr.mxu0 0.0
    %1157 = vmatpush2.msra.mxu0 0.0
    %1158 = vmatprep.subr.mxu0 0.0
    %1159 = vmatpush2.msra.mxu0 0.0
    %1160 = vmatprep.mubr.f32.mxu0 0.0
    %1161 = vmatmul.mubr.f32.gmra.mxu0 %v261
    %v1162 = vpop.f32.mrf.mxu0
    %v1163 = vadd.f32 0.0, %v1162
    %v1164 = vpop.f32.mrf.mxu0
    %v1165 = vadd.f32 0.0, %v1164
    %1166 = vdwg.mxu0
    %v1167 = vadd.f32 %v1074, %v1163
    %v1168 = vadd.f32 %v1076, %v1165
    %1169 = vrot.lane.b32.xlu0 %v26, 112
    %v1170 = vpop.permute.xlu0 %1169
    %1171 = vrot.lane.b32.xlu0 %v913, 112
    %v1172 = vpop.permute.xlu0 %1171
    %1173 = vrot.lane.b32.xlu0 %v27, 112
    %v1174 = vpop.permute.xlu0 %1173
    %v1175 = vsel %vm348, %v1170, %v1172
    %v1176 = vsel %vm348, %v1172, %v1174
    %v1179 = vsel %vm59, 0.0, %v1175
    %v1180 = vsel %vm60, 0.0, %v1176
    %v1182 = vsel %vm83, %v1179, 0
    %v1185 = vsel %vm83, %v1180, 0
    %1187 = vmatprep.subr.mxu0 0.0
    %1188 = vmatpush1.msra.mxu0 0.0
    %1189 = vmatprep.subr.mxu0 0.0
    %1190 = vmatpush1.msra.mxu0 0.0
    %1191 = vmatprep.subr.mxu0 0.0
    %1192 = vmatpush1.msra.mxu0 0.0
    %1193 = vmatprep.subr.mxu0 0.0
    %1194 = vmatpush1.msra.mxu0 0.0
    %1195 = vmatprep.subr.mxu0 0.0
    %1196 = vmatpush1.msra.mxu0 0.0
    %1197 = vmatprep.subr.mxu0 0.0
    %1198 = vmatpush1.msra.mxu0 0.0
    %1199 = vmatprep.subr.mxu0 0.0
    %1200 = vmatpush1.msra.mxu0 0.0
    %1201 = vmatprep.subr.mxu0 0.0
    %1202 = vmatpush1.msra.mxu0 0.0
    %1203 = vmatprep.subr.mxu0 0.0
    %1204 = vmatpush1.msra.mxu0 0.0
    %1205 = vmatprep.subr.mxu0 0.0
    %1206 = vmatpush1.msra.mxu0 0.0
    %1207 = vmatprep.subr.mxu0 0.0
    %1208 = vmatpush1.msra.mxu0 0.0
    %1209 = vmatprep.subr.mxu0 0.0
    %1210 = vmatpush1.msra.mxu0 0.0
    %1211 = vmatprep.subr.mxu0 0.0
    %1212 = vmatpush1.msra.mxu0 0.0
    %1213 = vmatprep.subr.mxu0 0.0
    %1214 = vmatpush1.msra.mxu0 0.0
    %1215 = vmatprep.subr.mxu0 0.0
    %1216 = vmatpush1.msra.mxu0 0.0
    %1217 = vmatprep.subr.mxu0 %v1185
    %1218 = vmatpush1.msra.mxu0 %v1182
    %1219 = vmatprep.subr.mxu0 0.0
    %1220 = vmatpush2.msra.mxu0 0.0
    %1221 = vmatprep.subr.mxu0 0.0
    %1222 = vmatpush2.msra.mxu0 0.0
    %1223 = vmatprep.subr.mxu0 0.0
    %1224 = vmatpush2.msra.mxu0 0.0
    %1225 = vmatprep.subr.mxu0 0.0
    %1226 = vmatpush2.msra.mxu0 0.0
    %1227 = vmatprep.subr.mxu0 0.0
    %1228 = vmatpush2.msra.mxu0 0.0
    %1229 = vmatprep.subr.mxu0 0.0
    %1230 = vmatpush2.msra.mxu0 0.0
    %1231 = vmatprep.subr.mxu0 0.0
    %1232 = vmatpush2.msra.mxu0 0.0
    %1233 = vmatprep.subr.mxu0 0.0
    %1234 = vmatpush2.msra.mxu0 0.0
    %1235 = vmatprep.subr.mxu0 0.0
    %1236 = vmatpush2.msra.mxu0 0.0
    %1237 = vmatprep.subr.mxu0 0.0
    %1238 = vmatpush2.msra.mxu0 0.0
    %1239 = vmatprep.subr.mxu0 0.0
    %1240 = vmatpush2.msra.mxu0 0.0
    %1241 = vmatprep.subr.mxu0 0.0
    %1242 = vmatpush2.msra.mxu0 0.0
    %1243 = vmatprep.subr.mxu0 0.0
    %1244 = vmatpush2.msra.mxu0 0.0
    %1245 = vmatprep.subr.mxu0 0.0
    %1246 = vmatpush2.msra.mxu0 0.0
    %1247 = vmatprep.subr.mxu0 0.0
    %1248 = vmatpush2.msra.mxu0 0.0
    %1249 = vmatprep.subr.mxu0 0.0
    %1250 = vmatpush2.msra.mxu0 0.0
    %1251 = vmatprep.mubr.f32.mxu0 0.0
    %1252 = vmatmul.mubr.f32.gmra.mxu0 %v358
    %v1253 = vpop.f32.mrf.mxu0
    %v1254 = vadd.f32 0.0, %v1253
    %v1255 = vpop.f32.mrf.mxu0
    %v1256 = vadd.f32 0.0, %v1255
    %1257 = vdwg.mxu0
    %v1258 = vadd.f32 %v1167, %v1254
    %v1259 = vadd.f32 %v1168, %v1256
    %1260 = vrot.lane.b32.xlu0 %v26, 111
    %v1261 = vpop.permute.xlu0 %1260
    %1262 = vrot.lane.b32.xlu0 %v913, 111
    %v1263 = vpop.permute.xlu0 %1262
    %1264 = vrot.lane.b32.xlu0 %v27, 111
    %v1265 = vpop.permute.xlu0 %1264
    %v1266 = vsel %vm447, %v1261, %v1263
    %v1267 = vsel %vm447, %v1263, %v1265
    %v1268 = vsel %vm83, %v1266, 0
    %v1270 = vsel %vm83, %v1267, 0
    %1272 = vmatprep.subr.mxu0 0.0
    %1273 = vmatpush1.msra.mxu0 0.0
    %1274 = vmatprep.subr.mxu0 0.0
    %1275 = vmatpush1.msra.mxu0 0.0
    %1276 = vmatprep.subr.mxu0 0.0
    %1277 = vmatpush1.msra.mxu0 0.0
    %1278 = vmatprep.subr.mxu0 0.0
    %1279 = vmatpush1.msra.mxu0 0.0
    %1280 = vmatprep.subr.mxu0 0.0
    %1281 = vmatpush1.msra.mxu0 0.0
    %1282 = vmatprep.subr.mxu0 0.0
    %1283 = vmatpush1.msra.mxu0 0.0
    %1284 = vmatprep.subr.mxu0 0.0
    %1285 = vmatpush1.msra.mxu0 0.0
    %1286 = vmatprep.subr.mxu0 0.0
    %1287 = vmatpush1.msra.mxu0 0.0
    %1288 = vmatprep.subr.mxu0 0.0
    %1289 = vmatpush1.msra.mxu0 0.0
    %1290 = vmatprep.subr.mxu0 0.0
    %1291 = vmatpush1.msra.mxu0 0.0
    %1292 = vmatprep.subr.mxu0 0.0
    %1293 = vmatpush1.msra.mxu0 0.0
    %1294 = vmatprep.subr.mxu0 0.0
    %1295 = vmatpush1.msra.mxu0 0.0
    %1296 = vmatprep.subr.mxu0 0.0
    %1297 = vmatpush1.msra.mxu0 0.0
    %1298 = vmatprep.subr.mxu0 0.0
    %1299 = vmatpush1.msra.mxu0 0.0
    %1300 = vmatprep.subr.mxu0 0.0
    %1301 = vmatpush1.msra.mxu0 0.0
    %1302 = vmatprep.subr.mxu0 %v1270
    %1303 = vmatpush1.msra.mxu0 %v1268
    %1304 = vmatprep.subr.mxu0 0.0
    %1305 = vmatpush2.msra.mxu0 0.0
    %1306 = vmatprep.subr.mxu0 0.0
    %1307 = vmatpush2.msra.mxu0 0.0
    %1308 = vmatprep.subr.mxu0 0.0
    %1309 = vmatpush2.msra.mxu0 0.0
    %1310 = vmatprep.subr.mxu0 0.0
    %1311 = vmatpush2.msra.mxu0 0.0
    %1312 = vmatprep.subr.mxu0 0.0
    %1313 = vmatpush2.msra.mxu0 0.0
    %1314 = vmatprep.subr.mxu0 0.0
    %1315 = vmatpush2.msra.mxu0 0.0
    %1316 = vmatprep.subr.mxu0 0.0
    %1317 = vmatpush2.msra.mxu0 0.0
    %1318 = vmatprep.subr.mxu0 0.0
    %1319 = vmatpush2.msra.mxu0 0.0
    %1320 = vmatprep.subr.mxu0 0.0
    %1321 = vmatpush2.msra.mxu0 0.0
    %1322 = vmatprep.subr.mxu0 0.0
    %1323 = vmatpush2.msra.mxu0 0.0
    %1324 = vmatprep.subr.mxu0 0.0
    %1325 = vmatpush2.msra.mxu0 0.0
    %1326 = vmatprep.subr.mxu0 0.0
    %1327 = vmatpush2.msra.mxu0 0.0
    %1328 = vmatprep.subr.mxu0 0.0
    %1329 = vmatpush2.msra.mxu0 0.0
    %1330 = vmatprep.subr.mxu0 0.0
    %1331 = vmatpush2.msra.mxu0 0.0
    %1332 = vmatprep.subr.mxu0 0.0
    %1333 = vmatpush2.msra.mxu0 0.0
    %1334 = vmatprep.subr.mxu0 0.0
    %1335 = vmatpush2.msra.mxu0 0.0
    %1336 = vmatprep.mubr.f32.mxu0 0.0
    %1337 = vmatmul.mubr.f32.gmra.mxu0 %v451
    %v1338 = vpop.f32.mrf.mxu0
    %v1339 = vadd.f32 0.0, %v1338
    %v1340 = vpop.f32.mrf.mxu0
    %v1341 = vadd.f32 0.0, %v1340
    %1342 = vdwg.mxu0
    %v1343 = vadd.f32 %v1258, %v1339
    %v1344 = vadd.f32 %v1259, %v1341
    %1345 = vrot.lane.b32.xlu0 %v26, 110
    %v1346 = vpop.permute.xlu0 %1345
    %1347 = vrot.lane.b32.xlu0 %v913, 110
    %v1348 = vpop.permute.xlu0 %1347
    %1349 = vrot.lane.b32.xlu0 %v27, 110
    %v1350 = vpop.permute.xlu0 %1349
    %v1351 = vsel %vm536, %v1346, %v1348
    %v1352 = vsel %vm536, %v1348, %v1350
    %v1355 = vsel %vm243, 0.0, %v1351
    %v1356 = vsel %vm244, 0.0, %v1352
    %v1358 = vsel %vm83, %v1355, 0
    %v1361 = vsel %vm83, %v1356, 0
    %1363 = vmatprep.subr.mxu0 0.0
    %1364 = vmatpush1.msra.mxu0 0.0
    %1365 = vmatprep.subr.mxu0 0.0
    %1366 = vmatpush1.msra.mxu0 0.0
    %1367 = vmatprep.subr.mxu0 0.0
    %1368 = vmatpush1.msra.mxu0 0.0
    %1369 = vmatprep.subr.mxu0 0.0
    %1370 = vmatpush1.msra.mxu0 0.0
    %1371 = vmatprep.subr.mxu0 0.0
    %1372 = vmatpush1.msra.mxu0 0.0
    %1373 = vmatprep.subr.mxu0 0.0
    %1374 = vmatpush1.msra.mxu0 0.0
    %1375 = vmatprep.subr.mxu0 0.0
    %1376 = vmatpush1.msra.mxu0 0.0
    %1377 = vmatprep.subr.mxu0 0.0
    %1378 = vmatpush1.msra.mxu0 0.0
    %1379 = vmatprep.subr.mxu0 0.0
    %1380 = vmatpush1.msra.mxu0 0.0
    %1381 = vmatprep.subr.mxu0 0.0
    %1382 = vmatpush1.msra.mxu0 0.0
    %1383 = vmatprep.subr.mxu0 0.0
    %1384 = vmatpush1.msra.mxu0 0.0
    %1385 = vmatprep.subr.mxu0 0.0
    %1386 = vmatpush1.msra.mxu0 0.0
    %1387 = vmatprep.subr.mxu0 0.0
    %1388 = vmatpush1.msra.mxu0 0.0
    %1389 = vmatprep.subr.mxu0 0.0
    %1390 = vmatpush1.msra.mxu0 0.0
    %1391 = vmatprep.subr.mxu0 0.0
    %1392 = vmatpush1.msra.mxu0 0.0
    %1393 = vmatprep.subr.mxu0 %v1361
    %1394 = vmatpush1.msra.mxu0 %v1358
    %1395 = vmatprep.subr.mxu0 0.0
    %1396 = vmatpush2.msra.mxu0 0.0
    %1397 = vmatprep.subr.mxu0 0.0
    %1398 = vmatpush2.msra.mxu0 0.0
    %1399 = vmatprep.subr.mxu0 0.0
    %1400 = vmatpush2.msra.mxu0 0.0
    %1401 = vmatprep.subr.mxu0 0.0
    %1402 = vmatpush2.msra.mxu0 0.0
    %1403 = vmatprep.subr.mxu0 0.0
    %1404 = vmatpush2.msra.mxu0 0.0
    %1405 = vmatprep.subr.mxu0 0.0
    %1406 = vmatpush2.msra.mxu0 0.0
    %1407 = vmatprep.subr.mxu0 0.0
    %1408 = vmatpush2.msra.mxu0 0.0
    %1409 = vmatprep.subr.mxu0 0.0
    %1410 = vmatpush2.msra.mxu0 0.0
    %1411 = vmatprep.subr.mxu0 0.0
    %1412 = vmatpush2.msra.mxu0 0.0
    %1413 = vmatprep.subr.mxu0 0.0
    %1414 = vmatpush2.msra.mxu0 0.0
    %1415 = vmatprep.subr.mxu0 0.0
    %1416 = vmatpush2.msra.mxu0 0.0
    %1417 = vmatprep.subr.mxu0 0.0
    %1418 = vmatpush2.msra.mxu0 0.0
    %1419 = vmatprep.subr.mxu0 0.0
    %1420 = vmatpush2.msra.mxu0 0.0
    %1421 = vmatprep.subr.mxu0 0.0
    %1422 = vmatpush2.msra.mxu0 0.0
    %1423 = vmatprep.subr.mxu0 0.0
    %1424 = vmatpush2.msra.mxu0 0.0
    %1425 = vmatprep.subr.mxu0 0.0
    %1426 = vmatpush2.msra.mxu0 0.0
    %1427 = vmatprep.mubr.f32.mxu0 0.0
    %1428 = vmatmul.mubr.f32.gmra.mxu0 %v546
    %v1429 = vpop.f32.mrf.mxu0
    %v1430 = vadd.f32 0.0, %v1429
    %v1431 = vpop.f32.mrf.mxu0
    %v1432 = vadd.f32 0.0, %v1431
    %1433 = vdwg.mxu0
    %v1434 = vadd.f32 %v1343, %v1430
    %v1435 = vadd.f32 %v1344, %v1432
    %1436 = vrot.lane.b32.xlu0 %v26, 96
    %v1437 = vpop.permute.xlu0 %1436
    %1438 = vrot.lane.b32.xlu0 %v913, 96
    %v1439 = vpop.permute.xlu0 %1438
    %1440 = vrot.lane.b32.xlu0 %v27, 96
    %v1441 = vpop.permute.xlu0 %1440
    %v1442 = vsel %vm633, %v1437, %v1439
    %v1443 = vsel %vm633, %v1439, %v1441
    %v1446 = vsel %vm59, 0.0, %v1442
    %v1447 = vsel %vm60, 0.0, %v1443
    %v1449 = vsel %vm83, %v1446, 0
    %v1452 = vsel %vm83, %v1447, 0
    %1454 = vmatprep.subr.mxu0 0.0
    %1455 = vmatpush1.msra.mxu0 0.0
    %1456 = vmatprep.subr.mxu0 0.0
    %1457 = vmatpush1.msra.mxu0 0.0
    %1458 = vmatprep.subr.mxu0 0.0
    %1459 = vmatpush1.msra.mxu0 0.0
    %1460 = vmatprep.subr.mxu0 0.0
    %1461 = vmatpush1.msra.mxu0 0.0
    %1462 = vmatprep.subr.mxu0 0.0
    %1463 = vmatpush1.msra.mxu0 0.0
    %1464 = vmatprep.subr.mxu0 0.0
    %1465 = vmatpush1.msra.mxu0 0.0
    %1466 = vmatprep.subr.mxu0 0.0
    %1467 = vmatpush1.msra.mxu0 0.0
    %1468 = vmatprep.subr.mxu0 0.0
    %1469 = vmatpush1.msra.mxu0 0.0
    %1470 = vmatprep.subr.mxu0 0.0
    %1471 = vmatpush1.msra.mxu0 0.0
    %1472 = vmatprep.subr.mxu0 0.0
    %1473 = vmatpush1.msra.mxu0 0.0
    %1474 = vmatprep.subr.mxu0 0.0
    %1475 = vmatpush1.msra.mxu0 0.0
    %1476 = vmatprep.subr.mxu0 0.0
    %1477 = vmatpush1.msra.mxu0 0.0
    %1478 = vmatprep.subr.mxu0 0.0
    %1479 = vmatpush1.msra.mxu0 0.0
    %1480 = vmatprep.subr.mxu0 0.0
    %1481 = vmatpush1.msra.mxu0 0.0
    %1482 = vmatprep.subr.mxu0 0.0
    %1483 = vmatpush1.msra.mxu0 0.0
    %1484 = vmatprep.subr.mxu0 %v1452
    %1485 = vmatpush1.msra.mxu0 %v1449
    %1486 = vmatprep.subr.mxu0 0.0
    %1487 = vmatpush2.msra.mxu0 0.0
    %1488 = vmatprep.subr.mxu0 0.0
    %1489 = vmatpush2.msra.mxu0 0.0
    %1490 = vmatprep.subr.mxu0 0.0
    %1491 = vmatpush2.msra.mxu0 0.0
    %1492 = vmatprep.subr.mxu0 0.0
    %1493 = vmatpush2.msra.mxu0 0.0
    %1494 = vmatprep.subr.mxu0 0.0
    %1495 = vmatpush2.msra.mxu0 0.0
    %1496 = vmatprep.subr.mxu0 0.0
    %1497 = vmatpush2.msra.mxu0 0.0
    %1498 = vmatprep.subr.mxu0 0.0
    %1499 = vmatpush2.msra.mxu0 0.0
    %1500 = vmatprep.subr.mxu0 0.0
    %1501 = vmatpush2.msra.mxu0 0.0
    %1502 = vmatprep.subr.mxu0 0.0
    %1503 = vmatpush2.msra.mxu0 0.0
    %1504 = vmatprep.subr.mxu0 0.0
    %1505 = vmatpush2.msra.mxu0 0.0
    %1506 = vmatprep.subr.mxu0 0.0
    %1507 = vmatpush2.msra.mxu0 0.0
    %1508 = vmatprep.subr.mxu0 0.0
    %1509 = vmatpush2.msra.mxu0 0.0
    %1510 = vmatprep.subr.mxu0 0.0
    %1511 = vmatpush2.msra.mxu0 0.0
    %1512 = vmatprep.subr.mxu0 0.0
    %1513 = vmatpush2.msra.mxu0 0.0
    %1514 = vmatprep.subr.mxu0 0.0
    %1515 = vmatpush2.msra.mxu0 0.0
    %1516 = vmatprep.subr.mxu0 0.0
    %1517 = vmatpush2.msra.mxu0 0.0
    %1518 = vmatprep.mubr.f32.mxu0 0.0
    %1519 = vmatmul.mubr.f32.gmra.mxu0 %v643
    %v1520 = vpop.f32.mrf.mxu0
    %v1521 = vadd.f32 0.0, %v1520
    %v1522 = vpop.f32.mrf.mxu0
    %v1523 = vadd.f32 0.0, %v1522
    %1524 = vdwg.mxu0
    %v1525 = vadd.f32 %v1434, %v1521
    %v1526 = vadd.f32 %v1435, %v1523
    %1527 = vrot.lane.b32.xlu0 %v26, 95
    %v1528 = vpop.permute.xlu0 %1527
    %1529 = vrot.lane.b32.xlu0 %v913, 95
    %v1530 = vpop.permute.xlu0 %1529
    %1531 = vrot.lane.b32.xlu0 %v27, 95
    %v1532 = vpop.permute.xlu0 %1531
    %v1533 = vsel %vm732, %v1528, %v1530
    %v1534 = vsel %vm732, %v1530, %v1532
    %v1535 = vsel %vm83, %v1533, 0
    %v1537 = vsel %vm83, %v1534, 0
    %1539 = vmatprep.subr.mxu0 0.0
    %1540 = vmatpush1.msra.mxu0 0.0
    %1541 = vmatprep.subr.mxu0 0.0
    %1542 = vmatpush1.msra.mxu0 0.0
    %1543 = vmatprep.subr.mxu0 0.0
    %1544 = vmatpush1.msra.mxu0 0.0
    %1545 = vmatprep.subr.mxu0 0.0
    %1546 = vmatpush1.msra.mxu0 0.0
    %1547 = vmatprep.subr.mxu0 0.0
    %1548 = vmatpush1.msra.mxu0 0.0
    %1549 = vmatprep.subr.mxu0 0.0
    %1550 = vmatpush1.msra.mxu0 0.0
    %1551 = vmatprep.subr.mxu0 0.0
    %1552 = vmatpush1.msra.mxu0 0.0
    %1553 = vmatprep.subr.mxu0 0.0
    %1554 = vmatpush1.msra.mxu0 0.0
    %1555 = vmatprep.subr.mxu0 0.0
    %1556 = vmatpush1.msra.mxu0 0.0
    %1557 = vmatprep.subr.mxu0 0.0
    %1558 = vmatpush1.msra.mxu0 0.0
    %1559 = vmatprep.subr.mxu0 0.0
    %1560 = vmatpush1.msra.mxu0 0.0
    %1561 = vmatprep.subr.mxu0 0.0
    %1562 = vmatpush1.msra.mxu0 0.0
    %1563 = vmatprep.subr.mxu0 0.0
    %1564 = vmatpush1.msra.mxu0 0.0
    %1565 = vmatprep.subr.mxu0 0.0
    %1566 = vmatpush1.msra.mxu0 0.0
    %1567 = vmatprep.subr.mxu0 0.0
    %1568 = vmatpush1.msra.mxu0 0.0
    %1569 = vmatprep.subr.mxu0 %v1537
    %1570 = vmatpush1.msra.mxu0 %v1535
    %1571 = vmatprep.subr.mxu0 0.0
    %1572 = vmatpush2.msra.mxu0 0.0
    %1573 = vmatprep.subr.mxu0 0.0
    %1574 = vmatpush2.msra.mxu0 0.0
    %1575 = vmatprep.subr.mxu0 0.0
    %1576 = vmatpush2.msra.mxu0 0.0
    %1577 = vmatprep.subr.mxu0 0.0
    %1578 = vmatpush2.msra.mxu0 0.0
    %1579 = vmatprep.subr.mxu0 0.0
    %1580 = vmatpush2.msra.mxu0 0.0
    %1581 = vmatprep.subr.mxu0 0.0
    %1582 = vmatpush2.msra.mxu0 0.0
    %1583 = vmatprep.subr.mxu0 0.0
    %1584 = vmatpush2.msra.mxu0 0.0
    %1585 = vmatprep.subr.mxu0 0.0
    %1586 = vmatpush2.msra.mxu0 0.0
    %1587 = vmatprep.subr.mxu0 0.0
    %1588 = vmatpush2.msra.mxu0 0.0
    %1589 = vmatprep.subr.mxu0 0.0
    %1590 = vmatpush2.msra.mxu0 0.0
    %1591 = vmatprep.subr.mxu0 0.0
    %1592 = vmatpush2.msra.mxu0 0.0
    %1593 = vmatprep.subr.mxu0 0.0
    %1594 = vmatpush2.msra.mxu0 0.0
    %1595 = vmatprep.subr.mxu0 0.0
    %1596 = vmatpush2.msra.mxu0 0.0
    %1597 = vmatprep.subr.mxu0 0.0
    %1598 = vmatpush2.msra.mxu0 0.0
    %1599 = vmatprep.subr.mxu0 0.0
    %1600 = vmatpush2.msra.mxu0 0.0
    %1601 = vmatprep.subr.mxu0 0.0
    %1602 = vmatpush2.msra.mxu0 0.0
    %1603 = vmatprep.mubr.f32.mxu0 0.0
    %1604 = vmatmul.mubr.f32.gmra.mxu0 %v736
    %v1605 = vpop.f32.mrf.mxu0
    %v1606 = vadd.f32 0.0, %v1605
    %v1607 = vpop.f32.mrf.mxu0
    %v1608 = vadd.f32 0.0, %v1607
    %1609 = vdwg.mxu0
    %v1610 = vadd.f32 %v1525, %v1606
    %v1611 = vadd.f32 %v1526, %v1608
    %1612 = vrot.lane.b32.xlu0 %v26, 94
    %v1613 = vpop.permute.xlu0 %1612
    %1614 = vrot.lane.b32.xlu0 %v913, 94
    %v1615 = vpop.permute.xlu0 %1614
    %1616 = vrot.lane.b32.xlu0 %v27, 94
    %v1617 = vpop.permute.xlu0 %1616
    %v1618 = vsel %vm821, %v1613, %v1615
    %v1619 = vsel %vm821, %v1615, %v1617
    %v1622 = vsel %vm243, 0.0, %v1618
    %v1623 = vsel %vm244, 0.0, %v1619
    %v1625 = vsel %vm83, %v1622, 0
    %v1628 = vsel %vm83, %v1623, 0
    %1630 = vmatprep.subr.mxu0 0.0
    %1631 = vmatpush1.msra.mxu0 0.0
    %1632 = vmatprep.subr.mxu0 0.0
    %1633 = vmatpush1.msra.mxu0 0.0
    %1634 = vmatprep.subr.mxu0 0.0
    %1635 = vmatpush1.msra.mxu0 0.0
    %1636 = vmatprep.subr.mxu0 0.0
    %1637 = vmatpush1.msra.mxu0 0.0
    %1638 = vmatprep.subr.mxu0 0.0
    %1639 = vmatpush1.msra.mxu0 0.0
    %1640 = vmatprep.subr.mxu0 0.0
    %1641 = vmatpush1.msra.mxu0 0.0
    %1642 = vmatprep.subr.mxu0 0.0
    %1643 = vmatpush1.msra.mxu0 0.0
    %1644 = vmatprep.subr.mxu0 0.0
    %1645 = vmatpush1.msra.mxu0 0.0
    %1646 = vmatprep.subr.mxu0 0.0
    %1647 = vmatpush1.msra.mxu0 0.0
    %1648 = vmatprep.subr.mxu0 0.0
    %1649 = vmatpush1.msra.mxu0 0.0
    %1650 = vmatprep.subr.mxu0 0.0
    %1651 = vmatpush1.msra.mxu0 0.0
    %1652 = vmatprep.subr.mxu0 0.0
    %1653 = vmatpush1.msra.mxu0 0.0
    %1654 = vmatprep.subr.mxu0 0.0
    %1655 = vmatpush1.msra.mxu0 0.0
    %1656 = vmatprep.subr.mxu0 0.0
    %1657 = vmatpush1.msra.mxu0 0.0
    %1658 = vmatprep.subr.mxu0 0.0
    %1659 = vmatpush1.msra.mxu0 0.0
    %1660 = vmatprep.subr.mxu0 %v1628
    %1661 = vmatpush1.msra.mxu0 %v1625
    %1662 = vmatprep.subr.mxu0 0.0
    %1663 = vmatpush2.msra.mxu0 0.0
    %1664 = vmatprep.subr.mxu0 0.0
    %1665 = vmatpush2.msra.mxu0 0.0
    %1666 = vmatprep.subr.mxu0 0.0
    %1667 = vmatpush2.msra.mxu0 0.0
    %1668 = vmatprep.subr.mxu0 0.0
    %1669 = vmatpush2.msra.mxu0 0.0
    %1670 = vmatprep.subr.mxu0 0.0
    %1671 = vmatpush2.msra.mxu0 0.0
    %1672 = vmatprep.subr.mxu0 0.0
    %1673 = vmatpush2.msra.mxu0 0.0
    %1674 = vmatprep.subr.mxu0 0.0
    %1675 = vmatpush2.msra.mxu0 0.0
    %1676 = vmatprep.subr.mxu0 0.0
    %1677 = vmatpush2.msra.mxu0 0.0
    %1678 = vmatprep.subr.mxu0 0.0
    %1679 = vmatpush2.msra.mxu0 0.0
    %1680 = vmatprep.subr.mxu0 0.0
    %1681 = vmatpush2.msra.mxu0 0.0
    %1682 = vmatprep.subr.mxu0 0.0
    %1683 = vmatpush2.msra.mxu0 0.0
    %1684 = vmatprep.subr.mxu0 0.0
    %1685 = vmatpush2.msra.mxu0 0.0
    %1686 = vmatprep.subr.mxu0 0.0
    %1687 = vmatpush2.msra.mxu0 0.0
    %1688 = vmatprep.subr.mxu0 0.0
    %1689 = vmatpush2.msra.mxu0 0.0
    %1690 = vmatprep.subr.mxu0 0.0
    %1691 = vmatpush2.msra.mxu0 0.0
    %1692 = vmatprep.subr.mxu0 0.0
    %1693 = vmatpush2.msra.mxu0 0.0
    %1694 = vmatprep.mubr.f32.mxu0 0.0
    %1695 = vmatmul.mubr.f32.gmra.mxu0 %v831
    %v1696 = vpop.f32.mrf.mxu0
    %v1697 = vadd.f32 0.0, %v1696
    %v1698 = vpop.f32.mrf.mxu0
    %v1699 = vadd.f32 0.0, %v1698
    %1700 = vdwg.mxu0
    %v1701 = vadd.f32 %v1610, %v1697
    %v1702 = vadd.f32 %v1611, %v1699
    %v1703 = vld [vmem:[%s2] sm:$0xff]
    %1705 = vset.pattern.permute.xlu0 0
    %1706 = vperm.xlu0 %1705, %v1703
    %v1707 = vpop.permute.xlu0 %1706
    %v1709 = vadd.f32 %v910, %v1707
    %v1710 = vadd.f32 %v911, %v1707
    %v1711 = vadd.f32 %v1701, %v1707
    %v1712 = vadd.f32 %v1702, %v1707
    %1713 = vst [vmem:[#allocation2] sm:$0xff] %v1709
    %1714 = vst [vmem:[#allocation2 + $0x8] sm:$0xff] %v1710
    %1715 = vst [vmem:[#allocation2 + $0x10] sm:$0xff] %v1711
    %1716 = vst [vmem:[#allocation2 + $0x18] sm:$0xff] %v1712
    %v1717 = vmax.f32 %v1709, 0.0
    %v1718 = vmax.f32 %v1710, 0.0
    %v1719 = vmax.f32 %v1711, 0.0
    %v1720 = vmax.f32 %v1712, 0.0
    %v1721 = vadd.f32 %v1717, %v1718
    %1722 = vadd.xlane.f32.xlu0 %v1721
    %v1723 = vpop.xlane.xlu0 %1722
    %v1724 = vadd.f32 %v1719, %v1720
    %1725 = vadd.xlane.f32.xlu0 %v1724
    %v1726 = vpop.xlane.xlu0 %1725
    %v1727 = vmul.f32 %v1723, 0.00390625
    %v1728 = vmul.f32 %v1726, 0.00390625
    %v1729 = vld [vmem:[%s3] sm:$0xff]
    %v1730 = vld [vmem:[%s4] sm:$0x1]
    %v1732 = vlaneseq
    %v1733 = vshrl.u32 %v1732, 7
    %v1734 = vsub.s32 0, %v1733
    %v1735 = vrot.slane %v1730, %v1734
    %v1739 = vlaneseq
    %v1740 = vshrl.u32 %v1739, 7
    %v1741 = vsub.s32 %v29, %v1740
    %v1742 = vrot.slane %v1727, %v1741
    %v1743 = vlaneseq
    %v1744 = vshrl.u32 %v1743, 7
    %v1745 = vsub.s32 %v29, %v1744
    %v1746 = vrot.slane %v1728, %v1745
    %vm1747 = vcmask 1041409
    %v1748 = vsel %vm1747, %v1746, %v1742
    %vm1749 = vcmask 64512
    %v1750 = vsel %vm1749, %v1748, 0
    %1752 = vmatprep.subr.mxu0 0.0
    %1753 = vmatpush1.msra.mxu0 0.0
    %1754 = vmatprep.subr.mxu0 0.0
    %1755 = vmatpush1.msra.mxu0 0.0
    %1756 = vmatprep.subr.mxu0 0.0
    %1757 = vmatpush1.msra.mxu0 0.0
    %1758 = vmatprep.subr.mxu0 0.0
    %1759 = vmatpush1.msra.mxu0 0.0
    %1760 = vmatprep.subr.mxu0 0.0
    %1761 = vmatpush1.msra.mxu0 0.0
    %1762 = vmatprep.subr.mxu0 0.0
    %1763 = vmatpush1.msra.mxu0 0.0
    %1764 = vmatprep.subr.mxu0 0.0
    %1765 = vmatpush1.msra.mxu0 0.0
    %1766 = vmatprep.subr.mxu0 0.0
    %1767 = vmatpush1.msra.mxu0 0.0
    %1768 = vmatprep.subr.mxu0 0.0
    %1769 = vmatpush1.msra.mxu0 0.0
    %1770 = vmatprep.subr.mxu0 0.0
    %1771 = vmatpush1.msra.mxu0 0.0
    %1772 = vmatprep.subr.mxu0 0.0
    %1773 = vmatpush1.msra.mxu0 0.0
    %1774 = vmatprep.subr.mxu0 0.0
    %1775 = vmatpush1.msra.mxu0 0.0
    %1776 = vmatprep.subr.mxu0 0.0
    %1777 = vmatpush1.msra.mxu0 0.0
    %1778 = vmatprep.subr.mxu0 0.0
    %1779 = vmatpush1.msra.mxu0 0.0
    %1780 = vmatprep.subr.mxu0 0.0
    %1781 = vmatpush1.msra.mxu0 0.0
    %1782 = vmatprep.subr.mxu0 0.0
    %1783 = vmatpush1.msra.mxu0 %v1729
    %1784 = vmatprep.subr.mxu0 0.0
    %1785 = vmatpush2.msra.mxu0 0.0
    %1786 = vmatprep.subr.mxu0 0.0
    %1787 = vmatpush2.msra.mxu0 0.0
    %1788 = vmatprep.subr.mxu0 0.0
    %1789 = vmatpush2.msra.mxu0 0.0
    %1790 = vmatprep.subr.mxu0 0.0
    %1791 = vmatpush2.msra.mxu0 0.0
    %1792 = vmatprep.subr.mxu0 0.0
    %1793 = vmatpush2.msra.mxu0 0.0
    %1794 = vmatprep.subr.mxu0 0.0
    %1795 = vmatpush2.msra.mxu0 0.0
    %1796 = vmatprep.subr.mxu0 0.0
    %1797 = vmatpush2.msra.mxu0 0.0
    %1798 = vmatprep.subr.mxu0 0.0
    %1799 = vmatpush2.msra.mxu0 0.0
    %1800 = vmatprep.subr.mxu0 0.0
    %1801 = vmatpush2.msra.mxu0 0.0
    %1802 = vmatprep.subr.mxu0 0.0
    %1803 = vmatpush2.msra.mxu0 0.0
    %1804 = vmatprep.subr.mxu0 0.0
    %1805 = vmatpush2.msra.mxu0 0.0
    %1806 = vmatprep.subr.mxu0 0.0
    %1807 = vmatpush2.msra.mxu0 0.0
    %1808 = vmatprep.subr.mxu0 0.0
    %1809 = vmatpush2.msra.mxu0 0.0
    %1810 = vmatprep.subr.mxu0 0.0
    %1811 = vmatpush2.msra.mxu0 0.0
    %1812 = vmatprep.subr.mxu0 0.0
    %1813 = vmatpush2.msra.mxu0 0.0
    %1814 = vmatprep.subr.mxu0 0.0
    %1815 = vmatpush2.msra.mxu0 0.0
    %1816 = vmatprep.mubr.f32.mxu0 0.0
    %1817 = vmatmul.mubr.f32.gmra.mxu0 %v1750
    %v1818 = vpop.f32.mrf.mxu0
    %v1819 = vadd.f32 %v1735, %v1818
    %v1820 = vpop.f32.mrf.mxu0
    %1821 = vdwg.mxu0
    %1822 = vst [vmem:[#allocation4] sm:$0x3] %v1819
    // Predicated region
    $region22: #{_fused_forward.1} parent=1 // pred_check
      _
    $region23: #{_fused_forward.1} parent=1 // pred_check_branch
      %1824 = sbr.rel (0) target = $region25
    $region24: #{_fused_forward.1} parent=1 // pred_region
      %s1826 = ssub.s32 512, 512
      %1827 = vsyncadd [#allocation3], %s1826
      %s1828 = sshll.u32 [#allocation2], 4
      %s1829 = int_to_ptr.vmem [resolvable:$true] %s1828
      %1834 = dma.vmem_to_hbm [thread:$0]  %s1829, 512, %s5, [#allocation3], 256, 256, 16
    $region25: #{_fused_forward.1} parent=1 // pred_fallthru
      _
    // Predicated region
    $region26: #{_fused_forward.1} parent=1 // pred_check
      _
    $region27: #{_fused_forward.1} parent=1 // pred_check_branch
      %1836 = sbr.rel (0) target = $region29
    $region28: #{_fused_forward.1} parent=1 // pred_region
      %s1838 = ssub.s32 32, 32
      %1839 = vsyncadd [#allocation5], %s1838
      %s1841 = sshll.u32 [#allocation4], 4
      %s1842 = int_to_ptr.vmem [resolvable:$true] %s1841
      %1844 = dma.vmem_to_hbm [thread:$0]  %s1842, 32, %s6, [#allocation5]
    $region29: #{_fused_forward.1} parent=1 // pred_fallthru
      _
    // Predicated region
    $region30: #{_fused_forward.1} parent=1 // pred_check
      _
    $region31: #{_fused_forward.1} parent=1 // pred_check_branch
      %1846 = sbr.rel (0) target = $region33
    $region32: #{_fused_forward.1} parent=1 // pred_region
      %1847 = dma.done [#allocation3], 512
    $region33: #{_fused_forward.1} parent=1 // pred_fallthru
      _
    // Predicated region
    $region34: #{_fused_forward.1} parent=1 // pred_check
      _
    $region35: #{_fused_forward.1} parent=1 // pred_check_branch
      %1849 = sbr.rel (0) target = $region37
    $region36: #{_fused_forward.1} parent=1 // pred_region
      %1850 = dma.done [#allocation5], 32
    $region37: #{_fused_forward.1} parent=1 // pred_fallthru
      _
    %1851 = vsyncpa [#allocation3], 1
    %1852 = vsyncpa [#allocation5], 1

</llo_original>
